<compile_context>
chip_gen: v7x
topology: tpu7x:2x2x1
jax: 0.10.0
libtpu: 0.0.40
codegen_flags: <defaults>
</compile_context>

<pallas_src>
import jax
import jax.numpy as jnp
from jax import lax
from jax.experimental import pallas as pl
from jax.experimental.pallas import tpu as pltpu


def qa_head_kernel(start_pos_ref, end_pos_ref,          # scalar-prefetch SMEM [B] i32
                   hidden_ref, w_ref, bias_ref,          # [TB,S,H] bf16, [2,H] bf16, [2] f32 SMEM
                   start_logits_ref, end_logits_ref,     # [TB,S] f32
                   ce_ref, start_idx_ref, end_idx_ref):  # [TB,1] f32 / i32 / i32
    TB, S = start_logits_ref.shape
    H = w_ref.shape[1]
    tile = pl.program_id(0)

    # qa_outputs Linear(H, 2) for the whole batch tile as one MXU matmul:
    #   [2, H] (bf16) @ [TB*S, H]^T (bf16) -> [2, TB*S] f32, sequence on lanes.
    h2 = hidden_ref[...].reshape(TB * S, H)               # free reshape (H stays minor)
    lgt_all = lax.dot_general(
        w_ref[...], h2,
        dimension_numbers=(((1,), (1,)), ((), ())),
        preferred_element_type=jnp.float32)               # [2, TB*S]

    b_start = bias_ref[0]                                 # SMEM scalars
    b_end = bias_ref[1]

    # Hoisted out of the loop (JAX does not CSE broadcasts).
    lane_iota = lax.broadcasted_iota(jnp.int32, (2, S), 1)
    row_iota = lax.broadcasted_iota(jnp.int32, (2, S), 0)

    sl_rows, el_rows, ce_rows, si_rows, ei_rows = [], [], [], [], []
    for b in range(TB):                                   # static, unrolled
        lgt = lgt_all[:, b * S:(b + 1) * S]               # [2,S], vreg-aligned lane slice

        # Row max is shared by log-sum-exp AND the train-mode argmax.
        m = jnp.max(lgt, axis=1, keepdims=True)                                 # [2,1]
        lse = jnp.log(jnp.sum(jnp.exp(lgt - m), axis=1, keepdims=True)) + m     # [2,1]

        row = tile * TB + b
        ps = start_pos_ref[row]                           # SMEM scalar reads
        pe = end_pos_ref[row]
        pos = jnp.where(row_iota == 0, ps, pe)            # row0 = start pos, row1 = end pos
        picked = jnp.sum(jnp.where(lane_iota == pos, lgt, 0.0),
                         axis=1, keepdims=True)           # [2,1]
        ce = lse - picked                                 # per-row bias cancels in CE

        # First-occurrence argmax (matches torch.max(dim=1)[1]); reuses m.
        idx = jnp.min(jnp.where(lgt == m, lane_iota, S), axis=1, keepdims=True)  # [2,1]

        sl_rows.append(lgt[0:1, :] + b_start)             # logits outputs include bias
        el_rows.append(lgt[1:2, :] + b_end)
        ce_rows.append(ce[0:1, :] + ce[1:2, :])           # start CE + end CE for this row
        si_rows.append(idx[0:1, :])
        ei_rows.append(idx[1:2, :])

    # Single full-tile stores (lane-dense last dim for the logits).
    start_logits_ref[...] = jnp.concatenate(sl_rows, axis=0)
    end_logits_ref[...] = jnp.concatenate(el_rows, axis=0)
    ce_ref[...] = jnp.concatenate(ce_rows, axis=0)
    start_idx_ref[...] = jnp.concatenate(si_rows, axis=0)
    end_idx_ref[...] = jnp.concatenate(ei_rows, axis=0)


def qa_head(hidden, w, bias, start_pos, end_pos, *, tb=8):
    """hidden: [B,S,H], w: [2,H], bias: [2], positions: [B] int32."""
    B, S, H = hidden.shape
    assert B % tb == 0 and (tb % 8 == 0 or tb == B)

    # Cast activations/weights to bf16 at the HBM boundary (halves DMA bytes);
    # MXU accumulates in f32, all CE/softmax math stays f32 (v5e-safe).
    hidden = hidden.astype(jnp.bfloat16)
    w = w.astype(jnp.bfloat16)
    bias = bias.astype(jnp.float32)
    start_pos = start_pos.reshape(B).astype(jnp.int32)
    end_pos = end_pos.reshape(B).astype(jnp.int32)

    grid_spec = pltpu.PrefetchScalarGridSpec(
        num_scalar_prefetch=2,                            # start/end positions -> SMEM
        grid=(B // tb,),
        in_specs=[
            pl.BlockSpec((tb, S, H), lambda i, sp, ep: (i, 0, 0)),   # hidden tile
            pl.BlockSpec((2, H), lambda i, sp, ep: (0, 0)),          # qa_outputs weight
            pl.BlockSpec(memory_space=pltpu.MemorySpace.SMEM),       # qa_outputs bias
        ],
        out_specs=(
            pl.BlockSpec((tb, S), lambda i, sp, ep: (i, 0)),
            pl.BlockSpec((tb, S), lambda i, sp, ep: (i, 0)),
            pl.BlockSpec((tb, 1), lambda i, sp, ep: (i, 0)),
            pl.BlockSpec((tb, 1), lambda i, sp, ep: (i, 0)),
            pl.BlockSpec((tb, 1), lambda i, sp, ep: (i, 0)),
        ),
    )
    out_shape = (
        jax.ShapeDtypeStruct((B, S), jnp.float32),        # start_logits
        jax.ShapeDtypeStruct((B, S), jnp.float32),        # end_logits
        jax.ShapeDtypeStruct((B, 1), jnp.float32),        # per-row (start+end) CE
        jax.ShapeDtypeStruct((B, 1), jnp.int32),          # train-mode start argmax
        jax.ShapeDtypeStruct((B, 1), jnp.int32),          # train-mode end argmax
    )
    sl, el, ce_rows, s_idx, e_idx = pl.pallas_call(
        qa_head_kernel,
        grid_spec=grid_spec,
        out_shape=out_shape,
        compiler_params=pltpu.CompilerParams(
            dimension_semantics=("parallel",)),           # batch tiles shard across TCs
    )(start_pos, end_pos, hidden, w, bias)

    # HF QA loss: 0.5 * (mean start CE + mean end CE) == 0.5 * mean(per-row sums).
    loss = 0.5 * jnp.mean(ce_rows)
    return sl, el, loss, s_idx[:, 0], e_idx[:, 0]


def reference(hidden, w, bias, start_pos, end_pos):
    logits = jnp.einsum('bsh,ch->cbs', hidden, w) + bias[:, None, None]
    sl, el = logits[0], logits[1]

    def ce(lg, pos):
        lse = jax.scipy.special.logsumexp(lg, axis=1)
        picked = jnp.take_along_axis(lg, pos[:, None], axis=1)[:, 0]
        return lse - picked

    loss = 0.5 * (jnp.mean(ce(sl, start_pos)) + jnp.mean(ce(el, end_pos)))
    return (sl, el, loss,
            jnp.argmax(sl, axis=1).astype(jnp.int32),
            jnp.argmax(el, axis=1).astype(jnp.int32))


if __name__ == "__main__":
    B, S, H = 16, 128, 256   # module uses hidden_size=768; small stand-in shapes
    key = jax.random.PRNGKey(0)
    k_h, k_w, k_b, k_s, k_e = jax.random.split(key, 5)
    hidden = jax.random.normal(k_h, (B, S, H), dtype=jnp.float32)
    w = 0.02 * jax.random.normal(k_w, (2, H), dtype=jnp.float32)    # qa_outputs weight
    bias = 0.01 * jax.random.normal(k_b, (2,), dtype=jnp.float32)   # qa_outputs bias
    start_pos = jax.random.randint(k_s, (B,), 0, S, dtype=jnp.int32)
    end_pos = jax.random.randint(k_e, (B,), 0, S, dtype=jnp.int32)

    sl, el, loss, s_idx, e_idx = jax.block_until_ready(
        qa_head(hidden, w, bias, start_pos, end_pos, tb=8))

    # Reference is evaluated on the same bf16-rounded activations/weights the
    # kernel consumes, so the check isolates the kernel math.
    hq = hidden.astype(jnp.bfloat16).astype(jnp.float32)
    wq = w.astype(jnp.bfloat16).astype(jnp.float32)
    rsl, rel, rloss, rs, re = reference(hq, wq, bias, start_pos, end_pos)

    assert jnp.allclose(sl, rsl, atol=1e-3, rtol=1e-3)
    assert jnp.allclose(el, rel, atol=1e-3, rtol=1e-3)
    assert jnp.allclose(loss, rloss, atol=1e-3, rtol=1e-3)
    assert jnp.array_equal(s_idx, rs)
    assert jnp.array_equal(e_idx, re)
    print("KERNEL_OK")
</pallas_src>

<mosaic_0001>
module attributes {stable_mosaic.version = 11 : i64} {
  func.func @qa_head_kernel(%arg0: i32, %arg1: memref<16xi32, #tpu.memory_space<smem>>, %arg2: memref<16xi32, #tpu.memory_space<smem>>, %arg3: memref<8x128x256xbf16, #tpu.memory_space<vmem>>, %arg4: memref<2x256xbf16, #tpu.memory_space<vmem>>, %arg5: memref<2xf32, #tpu.memory_space<smem>>, %arg6: memref<8x128xf32, #tpu.memory_space<vmem>>, %arg7: memref<8x128xf32, #tpu.memory_space<vmem>>, %arg8: memref<8x1xf32, #tpu.memory_space<vmem>>, %arg9: memref<8x1xi32, #tpu.memory_space<vmem>>, %arg10: memref<8x1xi32, #tpu.memory_space<vmem>>) attributes {dimension_semantics = [#tpu.dimension_semantics<parallel>], iteration_bounds = array<i64: 2>, scalar_prefetch = 2 : i64, scratch_operands = 0 : i64, tpu.core_type = #tpu.core_type<tc>, window_params = [{transform_indices = @transform_0, window_bounds = array<i64: 8, 128, 256>}, {pipeline_mode = #tpu.pipeline_mode<synchronous>, transform_indices = @transform_1, window_bounds = array<i64: 2, 256>}, {transform_indices = @transform_2, window_bounds = array<i64: 2>}, {transform_indices = @transform_3, window_bounds = array<i64: 8, 128>}, {transform_indices = @transform_4, window_bounds = array<i64: 8, 128>}, {transform_indices = @transform_5, window_bounds = array<i64: 8, 1>}, {transform_indices = @transform_6, window_bounds = array<i64: 8, 1>}, {transform_indices = @transform_7, window_bounds = array<i64: 8, 1>}]} {
    %c0 = arith.constant 0 : index
    %c0_0 = arith.constant 0 : index
    %c0_1 = arith.constant 0 : index
    %0 = vector.load %arg3[%c0, %c0_0, %c0_1] : memref<8x128x256xbf16, #tpu.memory_space<vmem>>, vector<8x128x256xbf16>
    %1 = vector.shape_cast %0 : vector<8x128x256xbf16> to vector<1024x256xbf16>
    %c0_2 = arith.constant 0 : index
    %c0_3 = arith.constant 0 : index
    %2 = vector.load %arg4[%c0_2, %c0_3] : memref<2x256xbf16, #tpu.memory_space<vmem>>, vector<2x256xbf16>
    %cst = arith.constant dense<0.000000e+00> : vector<2x1024xf32>
    %3 = tpu.matmul %2, %1, %cst {dimension_numbers = #tpu.dot_dimension_numbers<[1], [1], [0], [0], [0, 0, 1, 0], [], []>} : vector<2x256xbf16>, vector<1024x256xbf16>, vector<2x1024xf32> -> vector<2x1024xf32>
    %c0_4 = arith.constant 0 : index
    %4 = memref.load %arg5[%c0_4] : memref<2xf32, #tpu.memory_space<smem>>
    %c1 = arith.constant 1 : index
    %5 = memref.load %arg5[%c1] : memref<2xf32, #tpu.memory_space<smem>>
    %6 = tpu.iota {dimensions = array<i32: 1>} : vector<2x128xi32>
    %7 = tpu.iota {dimensions = array<i32: 0>} : vector<2x128xi32>
    %8 = vector.extract_strided_slice %3 {offsets = [0, 0], sizes = [2, 128], strides = [1, 1]} : vector<2x1024xf32> to vector<2x128xf32>
    %cst_5 = arith.constant dense<0xFF800000> : vector<2xf32>
    %9 = vector.multi_reduction <maximumf>, %8, %cst_5 [1] : vector<2x128xf32> to vector<2xf32>
    %10 = vector.shape_cast %9 : vector<2xf32> to vector<2x1xf32>
    %11 = vector.broadcast %10 : vector<2x1xf32> to vector<2x128xf32>
    %12 = arith.subf %8, %11 : vector<2x128xf32>
    %13 = math.exp %12 : vector<2x128xf32>
    %cst_6 = arith.constant dense<0.000000e+00> : vector<2xf32>
    %14 = vector.multi_reduction <add>, %13, %cst_6 [1] : vector<2x128xf32> to vector<2xf32>
    %15 = vector.shape_cast %14 : vector<2xf32> to vector<2x1xf32>
    %16 = math.log %15 : vector<2x1xf32>
    %17 = arith.addf %16, %10 : vector<2x1xf32>
    %c8_i32 = arith.constant 8 : i32
    %18 = arith.muli %arg0, %c8_i32 : i32
    %c0_i32 = arith.constant 0 : i32
    %19 = arith.addi %18, %c0_i32 : i32
    %20 = arith.index_cast %19 : i32 to index
    %21 = memref.load %arg1[%20] : memref<16xi32, #tpu.memory_space<smem>>
    %22 = arith.index_cast %19 : i32 to index
    %23 = memref.load %arg2[%22] : memref<16xi32, #tpu.memory_space<smem>>
    %c0_i32_7 = arith.constant 0 : i32
    %24 = vector.broadcast %c0_i32_7 : i32 to vector<2x128xi32>
    %25 = arith.cmpi eq, %7, %24 : vector<2x128xi32>
    %26 = vector.broadcast %21 : i32 to vector<2x128xi32>
    %27 = vector.broadcast %23 : i32 to vector<2x128xi32>
    %28 = arith.select %25, %26, %27 : vector<2x128xi1>, vector<2x128xi32>
    %29 = arith.cmpi eq, %6, %28 : vector<2x128xi32>
    %cst_8 = arith.constant 0.000000e+00 : f32
    %30 = vector.broadcast %cst_8 : f32 to vector<2x128xf32>
    %31 = arith.select %29, %8, %30 : vector<2x128xi1>, vector<2x128xf32>
    %cst_9 = arith.constant dense<0.000000e+00> : vector<2xf32>
    %32 = vector.multi_reduction <add>, %31, %cst_9 [1] : vector<2x128xf32> to vector<2xf32>
    %33 = vector.shape_cast %32 : vector<2xf32> to vector<2x1xf32>
    %34 = arith.subf %17, %33 : vector<2x1xf32>
    %35 = vector.broadcast %10 : vector<2x1xf32> to vector<2x128xf32>
    %36 = arith.cmpf oeq, %8, %35 : vector<2x128xf32>
    %c128_i32 = arith.constant 128 : i32
    %37 = vector.broadcast %c128_i32 : i32 to vector<2x128xi32>
    %38 = arith.select %36, %6, %37 : vector<2x128xi1>, vector<2x128xi32>
    %cst_10 = arith.constant dense<2147483647> : vector<2xi32>
    %39 = vector.multi_reduction <minsi>, %38, %cst_10 [1] : vector<2x128xi32> to vector<2xi32>
    %40 = vector.shape_cast %39 : vector<2xi32> to vector<2x1xi32>
    %41 = vector.extract_strided_slice %8 {offsets = [0, 0], sizes = [1, 128], strides = [1, 1]} : vector<2x128xf32> to vector<1x128xf32>
    %42 = vector.broadcast %4 : f32 to vector<1x128xf32>
    %43 = arith.addf %41, %42 : vector<1x128xf32>
    %44 = vector.extract_strided_slice %8 {offsets = [1, 0], sizes = [1, 128], strides = [1, 1]} : vector<2x128xf32> to vector<1x128xf32>
    %45 = vector.broadcast %5 : f32 to vector<1x128xf32>
    %46 = arith.addf %44, %45 : vector<1x128xf32>
    %47 = vector.extract_strided_slice %34 {offsets = [0, 0], sizes = [1, 1], strides = [1, 1]} : vector<2x1xf32> to vector<1x1xf32>
    %48 = vector.extract_strided_slice %34 {offsets = [1, 0], sizes = [1, 1], strides = [1, 1]} : vector<2x1xf32> to vector<1x1xf32>
    %49 = arith.addf %47, %48 : vector<1x1xf32>
    %50 = vector.extract_strided_slice %40 {offsets = [0, 0], sizes = [1, 1], strides = [1, 1]} : vector<2x1xi32> to vector<1x1xi32>
    %51 = vector.extract_strided_slice %40 {offsets = [1, 0], sizes = [1, 1], strides = [1, 1]} : vector<2x1xi32> to vector<1x1xi32>
    %52 = vector.extract_strided_slice %3 {offsets = [0, 128], sizes = [2, 128], strides = [1, 1]} : vector<2x1024xf32> to vector<2x128xf32>
    %cst_11 = arith.constant dense<0xFF800000> : vector<2xf32>
    %53 = vector.multi_reduction <maximumf>, %52, %cst_11 [1] : vector<2x128xf32> to vector<2xf32>
    %54 = vector.shape_cast %53 : vector<2xf32> to vector<2x1xf32>
    %55 = vector.broadcast %54 : vector<2x1xf32> to vector<2x128xf32>
    %56 = arith.subf %52, %55 : vector<2x128xf32>
    %57 = math.exp %56 : vector<2x128xf32>
    %cst_12 = arith.constant dense<0.000000e+00> : vector<2xf32>
    %58 = vector.multi_reduction <add>, %57, %cst_12 [1] : vector<2x128xf32> to vector<2xf32>
    %59 = vector.shape_cast %58 : vector<2xf32> to vector<2x1xf32>
    %60 = math.log %59 : vector<2x1xf32>
    %61 = arith.addf %60, %54 : vector<2x1xf32>
    %c8_i32_13 = arith.constant 8 : i32
    %62 = arith.muli %arg0, %c8_i32_13 : i32
    %c1_i32 = arith.constant 1 : i32
    %63 = arith.addi %62, %c1_i32 : i32
    %64 = arith.index_cast %63 : i32 to index
    %65 = memref.load %arg1[%64] : memref<16xi32, #tpu.memory_space<smem>>
    %66 = arith.index_cast %63 : i32 to index
    %67 = memref.load %arg2[%66] : memref<16xi32, #tpu.memory_space<smem>>
    %c0_i32_14 = arith.constant 0 : i32
    %68 = vector.broadcast %c0_i32_14 : i32 to vector<2x128xi32>
    %69 = arith.cmpi eq, %7, %68 : vector<2x128xi32>
    %70 = vector.broadcast %65 : i32 to vector<2x128xi32>
    %71 = vector.broadcast %67 : i32 to vector<2x128xi32>
    %72 = arith.select %69, %70, %71 : vector<2x128xi1>, vector<2x128xi32>
    %73 = arith.cmpi eq, %6, %72 : vector<2x128xi32>
    %cst_15 = arith.constant 0.000000e+00 : f32
    %74 = vector.broadcast %cst_15 : f32 to vector<2x128xf32>
    %75 = arith.select %73, %52, %74 : vector<2x128xi1>, vector<2x128xf32>
    %cst_16 = arith.constant dense<0.000000e+00> : vector<2xf32>
    %76 = vector.multi_reduction <add>, %75, %cst_16 [1] : vector<2x128xf32> to vector<2xf32>
    %77 = vector.shape_cast %76 : vector<2xf32> to vector<2x1xf32>
    %78 = arith.subf %61, %77 : vector<2x1xf32>
    %79 = vector.broadcast %54 : vector<2x1xf32> to vector<2x128xf32>
    %80 = arith.cmpf oeq, %52, %79 : vector<2x128xf32>
    %c128_i32_17 = arith.constant 128 : i32
    %81 = vector.broadcast %c128_i32_17 : i32 to vector<2x128xi32>
    %82 = arith.select %80, %6, %81 : vector<2x128xi1>, vector<2x128xi32>
    %cst_18 = arith.constant dense<2147483647> : vector<2xi32>
    %83 = vector.multi_reduction <minsi>, %82, %cst_18 [1] : vector<2x128xi32> to vector<2xi32>
    %84 = vector.shape_cast %83 : vector<2xi32> to vector<2x1xi32>
    %85 = vector.extract_strided_slice %52 {offsets = [0, 0], sizes = [1, 128], strides = [1, 1]} : vector<2x128xf32> to vector<1x128xf32>
    %86 = vector.broadcast %4 : f32 to vector<1x128xf32>
    %87 = arith.addf %85, %86 : vector<1x128xf32>
    %88 = vector.extract_strided_slice %52 {offsets = [1, 0], sizes = [1, 128], strides = [1, 1]} : vector<2x128xf32> to vector<1x128xf32>
    %89 = vector.broadcast %5 : f32 to vector<1x128xf32>
    %90 = arith.addf %88, %89 : vector<1x128xf32>
    %91 = vector.extract_strided_slice %78 {offsets = [0, 0], sizes = [1, 1], strides = [1, 1]} : vector<2x1xf32> to vector<1x1xf32>
    %92 = vector.extract_strided_slice %78 {offsets = [1, 0], sizes = [1, 1], strides = [1, 1]} : vector<2x1xf32> to vector<1x1xf32>
    %93 = arith.addf %91, %92 : vector<1x1xf32>
    %94 = vector.extract_strided_slice %84 {offsets = [0, 0], sizes = [1, 1], strides = [1, 1]} : vector<2x1xi32> to vector<1x1xi32>
    %95 = vector.extract_strided_slice %84 {offsets = [1, 0], sizes = [1, 1], strides = [1, 1]} : vector<2x1xi32> to vector<1x1xi32>
    %96 = vector.extract_strided_slice %3 {offsets = [0, 256], sizes = [2, 128], strides = [1, 1]} : vector<2x1024xf32> to vector<2x128xf32>
    %cst_19 = arith.constant dense<0xFF800000> : vector<2xf32>
    %97 = vector.multi_reduction <maximumf>, %96, %cst_19 [1] : vector<2x128xf32> to vector<2xf32>
    %98 = vector.shape_cast %97 : vector<2xf32> to vector<2x1xf32>
    %99 = vector.broadcast %98 : vector<2x1xf32> to vector<2x128xf32>
    %100 = arith.subf %96, %99 : vector<2x128xf32>
    %101 = math.exp %100 : vector<2x128xf32>
    %cst_20 = arith.constant dense<0.000000e+00> : vector<2xf32>
    %102 = vector.multi_reduction <add>, %101, %cst_20 [1] : vector<2x128xf32> to vector<2xf32>
    %103 = vector.shape_cast %102 : vector<2xf32> to vector<2x1xf32>
    %104 = math.log %103 : vector<2x1xf32>
    %105 = arith.addf %104, %98 : vector<2x1xf32>
    %c8_i32_21 = arith.constant 8 : i32
    %106 = arith.muli %arg0, %c8_i32_21 : i32
    %c2_i32 = arith.constant 2 : i32
    %107 = arith.addi %106, %c2_i32 : i32
    %108 = arith.index_cast %107 : i32 to index
    %109 = memref.load %arg1[%108] : memref<16xi32, #tpu.memory_space<smem>>
    %110 = arith.index_cast %107 : i32 to index
    %111 = memref.load %arg2[%110] : memref<16xi32, #tpu.memory_space<smem>>
    %c0_i32_22 = arith.constant 0 : i32
    %112 = vector.broadcast %c0_i32_22 : i32 to vector<2x128xi32>
    %113 = arith.cmpi eq, %7, %112 : vector<2x128xi32>
    %114 = vector.broadcast %109 : i32 to vector<2x128xi32>
    %115 = vector.broadcast %111 : i32 to vector<2x128xi32>
    %116 = arith.select %113, %114, %115 : vector<2x128xi1>, vector<2x128xi32>
    %117 = arith.cmpi eq, %6, %116 : vector<2x128xi32>
    %cst_23 = arith.constant 0.000000e+00 : f32
    %118 = vector.broadcast %cst_23 : f32 to vector<2x128xf32>
    %119 = arith.select %117, %96, %118 : vector<2x128xi1>, vector<2x128xf32>
    %cst_24 = arith.constant dense<0.000000e+00> : vector<2xf32>
    %120 = vector.multi_reduction <add>, %119, %cst_24 [1] : vector<2x128xf32> to vector<2xf32>
    %121 = vector.shape_cast %120 : vector<2xf32> to vector<2x1xf32>
    %122 = arith.subf %105, %121 : vector<2x1xf32>
    %123 = vector.broadcast %98 : vector<2x1xf32> to vector<2x128xf32>
    %124 = arith.cmpf oeq, %96, %123 : vector<2x128xf32>
    %c128_i32_25 = arith.constant 128 : i32
    %125 = vector.broadcast %c128_i32_25 : i32 to vector<2x128xi32>
    %126 = arith.select %124, %6, %125 : vector<2x128xi1>, vector<2x128xi32>
    %cst_26 = arith.constant dense<2147483647> : vector<2xi32>
    %127 = vector.multi_reduction <minsi>, %126, %cst_26 [1] : vector<2x128xi32> to vector<2xi32>
    %128 = vector.shape_cast %127 : vector<2xi32> to vector<2x1xi32>
    %129 = vector.extract_strided_slice %96 {offsets = [0, 0], sizes = [1, 128], strides = [1, 1]} : vector<2x128xf32> to vector<1x128xf32>
    %130 = vector.broadcast %4 : f32 to vector<1x128xf32>
    %131 = arith.addf %129, %130 : vector<1x128xf32>
    %132 = vector.extract_strided_slice %96 {offsets = [1, 0], sizes = [1, 128], strides = [1, 1]} : vector<2x128xf32> to vector<1x128xf32>
    %133 = vector.broadcast %5 : f32 to vector<1x128xf32>
    %134 = arith.addf %132, %133 : vector<1x128xf32>
    %135 = vector.extract_strided_slice %122 {offsets = [0, 0], sizes = [1, 1], strides = [1, 1]} : vector<2x1xf32> to vector<1x1xf32>
    %136 = vector.extract_strided_slice %122 {offsets = [1, 0], sizes = [1, 1], strides = [1, 1]} : vector<2x1xf32> to vector<1x1xf32>
    %137 = arith.addf %135, %136 : vector<1x1xf32>
    %138 = vector.extract_strided_slice %128 {offsets = [0, 0], sizes = [1, 1], strides = [1, 1]} : vector<2x1xi32> to vector<1x1xi32>
    %139 = vector.extract_strided_slice %128 {offsets = [1, 0], sizes = [1, 1], strides = [1, 1]} : vector<2x1xi32> to vector<1x1xi32>
    %140 = vector.extract_strided_slice %3 {offsets = [0, 384], sizes = [2, 128], strides = [1, 1]} : vector<2x1024xf32> to vector<2x128xf32>
    %cst_27 = arith.constant dense<0xFF800000> : vector<2xf32>
    %141 = vector.multi_reduction <maximumf>, %140, %cst_27 [1] : vector<2x128xf32> to vector<2xf32>
    %142 = vector.shape_cast %141 : vector<2xf32> to vector<2x1xf32>
    %143 = vector.broadcast %142 : vector<2x1xf32> to vector<2x128xf32>
    %144 = arith.subf %140, %143 : vector<2x128xf32>
    %145 = math.exp %144 : vector<2x128xf32>
    %cst_28 = arith.constant dense<0.000000e+00> : vector<2xf32>
    %146 = vector.multi_reduction <add>, %145, %cst_28 [1] : vector<2x128xf32> to vector<2xf32>
    %147 = vector.shape_cast %146 : vector<2xf32> to vector<2x1xf32>
    %148 = math.log %147 : vector<2x1xf32>
    %149 = arith.addf %148, %142 : vector<2x1xf32>
    %c8_i32_29 = arith.constant 8 : i32
    %150 = arith.muli %arg0, %c8_i32_29 : i32
    %c3_i32 = arith.constant 3 : i32
    %151 = arith.addi %150, %c3_i32 : i32
    %152 = arith.index_cast %151 : i32 to index
    %153 = memref.load %arg1[%152] : memref<16xi32, #tpu.memory_space<smem>>
    %154 = arith.index_cast %151 : i32 to index
    %155 = memref.load %arg2[%154] : memref<16xi32, #tpu.memory_space<smem>>
    %c0_i32_30 = arith.constant 0 : i32
    %156 = vector.broadcast %c0_i32_30 : i32 to vector<2x128xi32>
    %157 = arith.cmpi eq, %7, %156 : vector<2x128xi32>
    %158 = vector.broadcast %153 : i32 to vector<2x128xi32>
    %159 = vector.broadcast %155 : i32 to vector<2x128xi32>
    %160 = arith.select %157, %158, %159 : vector<2x128xi1>, vector<2x128xi32>
    %161 = arith.cmpi eq, %6, %160 : vector<2x128xi32>
    %cst_31 = arith.constant 0.000000e+00 : f32
    %162 = vector.broadcast %cst_31 : f32 to vector<2x128xf32>
    %163 = arith.select %161, %140, %162 : vector<2x128xi1>, vector<2x128xf32>
    %cst_32 = arith.constant dense<0.000000e+00> : vector<2xf32>
    %164 = vector.multi_reduction <add>, %163, %cst_32 [1] : vector<2x128xf32> to vector<2xf32>
    %165 = vector.shape_cast %164 : vector<2xf32> to vector<2x1xf32>
    %166 = arith.subf %149, %165 : vector<2x1xf32>
    %167 = vector.broadcast %142 : vector<2x1xf32> to vector<2x128xf32>
    %168 = arith.cmpf oeq, %140, %167 : vector<2x128xf32>
    %c128_i32_33 = arith.constant 128 : i32
    %169 = vector.broadcast %c128_i32_33 : i32 to vector<2x128xi32>
    %170 = arith.select %168, %6, %169 : vector<2x128xi1>, vector<2x128xi32>
    %cst_34 = arith.constant dense<2147483647> : vector<2xi32>
    %171 = vector.multi_reduction <minsi>, %170, %cst_34 [1] : vector<2x128xi32> to vector<2xi32>
    %172 = vector.shape_cast %171 : vector<2xi32> to vector<2x1xi32>
    %173 = vector.extract_strided_slice %140 {offsets = [0, 0], sizes = [1, 128], strides = [1, 1]} : vector<2x128xf32> to vector<1x128xf32>
    %174 = vector.broadcast %4 : f32 to vector<1x128xf32>
    %175 = arith.addf %173, %174 : vector<1x128xf32>
    %176 = vector.extract_strided_slice %140 {offsets = [1, 0], sizes = [1, 128], strides = [1, 1]} : vector<2x128xf32> to vector<1x128xf32>
    %177 = vector.broadcast %5 : f32 to vector<1x128xf32>
    %178 = arith.addf %176, %177 : vector<1x128xf32>
    %179 = vector.extract_strided_slice %166 {offsets = [0, 0], sizes = [1, 1], strides = [1, 1]} : vector<2x1xf32> to vector<1x1xf32>
    %180 = vector.extract_strided_slice %166 {offsets = [1, 0], sizes = [1, 1], strides = [1, 1]} : vector<2x1xf32> to vector<1x1xf32>
    %181 = arith.addf %179, %180 : vector<1x1xf32>
    %182 = vector.extract_strided_slice %172 {offsets = [0, 0], sizes = [1, 1], strides = [1, 1]} : vector<2x1xi32> to vector<1x1xi32>
    %183 = vector.extract_strided_slice %172 {offsets = [1, 0], sizes = [1, 1], strides = [1, 1]} : vector<2x1xi32> to vector<1x1xi32>
    %184 = vector.extract_strided_slice %3 {offsets = [0, 512], sizes = [2, 128], strides = [1, 1]} : vector<2x1024xf32> to vector<2x128xf32>
    %cst_35 = arith.constant dense<0xFF800000> : vector<2xf32>
    %185 = vector.multi_reduction <maximumf>, %184, %cst_35 [1] : vector<2x128xf32> to vector<2xf32>
    %186 = vector.shape_cast %185 : vector<2xf32> to vector<2x1xf32>
    %187 = vector.broadcast %186 : vector<2x1xf32> to vector<2x128xf32>
    %188 = arith.subf %184, %187 : vector<2x128xf32>
    %189 = math.exp %188 : vector<2x128xf32>
    %cst_36 = arith.constant dense<0.000000e+00> : vector<2xf32>
    %190 = vector.multi_reduction <add>, %189, %cst_36 [1] : vector<2x128xf32> to vector<2xf32>
    %191 = vector.shape_cast %190 : vector<2xf32> to vector<2x1xf32>
    %192 = math.log %191 : vector<2x1xf32>
    %193 = arith.addf %192, %186 : vector<2x1xf32>
    %c8_i32_37 = arith.constant 8 : i32
    %194 = arith.muli %arg0, %c8_i32_37 : i32
    %c4_i32 = arith.constant 4 : i32
    %195 = arith.addi %194, %c4_i32 : i32
    %196 = arith.index_cast %195 : i32 to index
    %197 = memref.load %arg1[%196] : memref<16xi32, #tpu.memory_space<smem>>
    %198 = arith.index_cast %195 : i32 to index
    %199 = memref.load %arg2[%198] : memref<16xi32, #tpu.memory_space<smem>>
    %c0_i32_38 = arith.constant 0 : i32
    %200 = vector.broadcast %c0_i32_38 : i32 to vector<2x128xi32>
    %201 = arith.cmpi eq, %7, %200 : vector<2x128xi32>
    %202 = vector.broadcast %197 : i32 to vector<2x128xi32>
    %203 = vector.broadcast %199 : i32 to vector<2x128xi32>
    %204 = arith.select %201, %202, %203 : vector<2x128xi1>, vector<2x128xi32>
    %205 = arith.cmpi eq, %6, %204 : vector<2x128xi32>
    %cst_39 = arith.constant 0.000000e+00 : f32
    %206 = vector.broadcast %cst_39 : f32 to vector<2x128xf32>
    %207 = arith.select %205, %184, %206 : vector<2x128xi1>, vector<2x128xf32>
    %cst_40 = arith.constant dense<0.000000e+00> : vector<2xf32>
    %208 = vector.multi_reduction <add>, %207, %cst_40 [1] : vector<2x128xf32> to vector<2xf32>
    %209 = vector.shape_cast %208 : vector<2xf32> to vector<2x1xf32>
    %210 = arith.subf %193, %209 : vector<2x1xf32>
    %211 = vector.broadcast %186 : vector<2x1xf32> to vector<2x128xf32>
    %212 = arith.cmpf oeq, %184, %211 : vector<2x128xf32>
    %c128_i32_41 = arith.constant 128 : i32
    %213 = vector.broadcast %c128_i32_41 : i32 to vector<2x128xi32>
    %214 = arith.select %212, %6, %213 : vector<2x128xi1>, vector<2x128xi32>
    %cst_42 = arith.constant dense<2147483647> : vector<2xi32>
    %215 = vector.multi_reduction <minsi>, %214, %cst_42 [1] : vector<2x128xi32> to vector<2xi32>
    %216 = vector.shape_cast %215 : vector<2xi32> to vector<2x1xi32>
    %217 = vector.extract_strided_slice %184 {offsets = [0, 0], sizes = [1, 128], strides = [1, 1]} : vector<2x128xf32> to vector<1x128xf32>
    %218 = vector.broadcast %4 : f32 to vector<1x128xf32>
    %219 = arith.addf %217, %218 : vector<1x128xf32>
    %220 = vector.extract_strided_slice %184 {offsets = [1, 0], sizes = [1, 128], strides = [1, 1]} : vector<2x128xf32> to vector<1x128xf32>
    %221 = vector.broadcast %5 : f32 to vector<1x128xf32>
    %222 = arith.addf %220, %221 : vector<1x128xf32>
    %223 = vector.extract_strided_slice %210 {offsets = [0, 0], sizes = [1, 1], strides = [1, 1]} : vector<2x1xf32> to vector<1x1xf32>
    %224 = vector.extract_strided_slice %210 {offsets = [1, 0], sizes = [1, 1], strides = [1, 1]} : vector<2x1xf32> to vector<1x1xf32>
    %225 = arith.addf %223, %224 : vector<1x1xf32>
    %226 = vector.extract_strided_slice %216 {offsets = [0, 0], sizes = [1, 1], strides = [1, 1]} : vector<2x1xi32> to vector<1x1xi32>
    %227 = vector.extract_strided_slice %216 {offsets = [1, 0], sizes = [1, 1], strides = [1, 1]} : vector<2x1xi32> to vector<1x1xi32>
    %228 = vector.extract_strided_slice %3 {offsets = [0, 640], sizes = [2, 128], strides = [1, 1]} : vector<2x1024xf32> to vector<2x128xf32>
    %cst_43 = arith.constant dense<0xFF800000> : vector<2xf32>
    %229 = vector.multi_reduction <maximumf>, %228, %cst_43 [1] : vector<2x128xf32> to vector<2xf32>
    %230 = vector.shape_cast %229 : vector<2xf32> to vector<2x1xf32>
    %231 = vector.broadcast %230 : vector<2x1xf32> to vector<2x128xf32>
    %232 = arith.subf %228, %231 : vector<2x128xf32>
    %233 = math.exp %232 : vector<2x128xf32>
    %cst_44 = arith.constant dense<0.000000e+00> : vector<2xf32>
    %234 = vector.multi_reduction <add>, %233, %cst_44 [1] : vector<2x128xf32> to vector<2xf32>
    %235 = vector.shape_cast %234 : vector<2xf32> to vector<2x1xf32>
    %236 = math.log %235 : vector<2x1xf32>
    %237 = arith.addf %236, %230 : vector<2x1xf32>
    %c8_i32_45 = arith.constant 8 : i32
    %238 = arith.muli %arg0, %c8_i32_45 : i32
    %c5_i32 = arith.constant 5 : i32
    %239 = arith.addi %238, %c5_i32 : i32
    %240 = arith.index_cast %239 : i32 to index
    %241 = memref.load %arg1[%240] : memref<16xi32, #tpu.memory_space<smem>>
    %242 = arith.index_cast %239 : i32 to index
    %243 = memref.load %arg2[%242] : memref<16xi32, #tpu.memory_space<smem>>
    %c0_i32_46 = arith.constant 0 : i32
    %244 = vector.broadcast %c0_i32_46 : i32 to vector<2x128xi32>
    %245 = arith.cmpi eq, %7, %244 : vector<2x128xi32>
    %246 = vector.broadcast %241 : i32 to vector<2x128xi32>
    %247 = vector.broadcast %243 : i32 to vector<2x128xi32>
    %248 = arith.select %245, %246, %247 : vector<2x128xi1>, vector<2x128xi32>
    %249 = arith.cmpi eq, %6, %248 : vector<2x128xi32>
    %cst_47 = arith.constant 0.000000e+00 : f32
    %250 = vector.broadcast %cst_47 : f32 to vector<2x128xf32>
    %251 = arith.select %249, %228, %250 : vector<2x128xi1>, vector<2x128xf32>
    %cst_48 = arith.constant dense<0.000000e+00> : vector<2xf32>
    %252 = vector.multi_reduction <add>, %251, %cst_48 [1] : vector<2x128xf32> to vector<2xf32>
    %253 = vector.shape_cast %252 : vector<2xf32> to vector<2x1xf32>
    %254 = arith.subf %237, %253 : vector<2x1xf32>
    %255 = vector.broadcast %230 : vector<2x1xf32> to vector<2x128xf32>
    %256 = arith.cmpf oeq, %228, %255 : vector<2x128xf32>
    %c128_i32_49 = arith.constant 128 : i32
    %257 = vector.broadcast %c128_i32_49 : i32 to vector<2x128xi32>
    %258 = arith.select %256, %6, %257 : vector<2x128xi1>, vector<2x128xi32>
    %cst_50 = arith.constant dense<2147483647> : vector<2xi32>
    %259 = vector.multi_reduction <minsi>, %258, %cst_50 [1] : vector<2x128xi32> to vector<2xi32>
    %260 = vector.shape_cast %259 : vector<2xi32> to vector<2x1xi32>
    %261 = vector.extract_strided_slice %228 {offsets = [0, 0], sizes = [1, 128], strides = [1, 1]} : vector<2x128xf32> to vector<1x128xf32>
    %262 = vector.broadcast %4 : f32 to vector<1x128xf32>
    %263 = arith.addf %261, %262 : vector<1x128xf32>
    %264 = vector.extract_strided_slice %228 {offsets = [1, 0], sizes = [1, 128], strides = [1, 1]} : vector<2x128xf32> to vector<1x128xf32>
    %265 = vector.broadcast %5 : f32 to vector<1x128xf32>
    %266 = arith.addf %264, %265 : vector<1x128xf32>
    %267 = vector.extract_strided_slice %254 {offsets = [0, 0], sizes = [1, 1], strides = [1, 1]} : vector<2x1xf32> to vector<1x1xf32>
    %268 = vector.extract_strided_slice %254 {offsets = [1, 0], sizes = [1, 1], strides = [1, 1]} : vector<2x1xf32> to vector<1x1xf32>
    %269 = arith.addf %267, %268 : vector<1x1xf32>
    %270 = vector.extract_strided_slice %260 {offsets = [0, 0], sizes = [1, 1], strides = [1, 1]} : vector<2x1xi32> to vector<1x1xi32>
    %271 = vector.extract_strided_slice %260 {offsets = [1, 0], sizes = [1, 1], strides = [1, 1]} : vector<2x1xi32> to vector<1x1xi32>
    %272 = vector.extract_strided_slice %3 {offsets = [0, 768], sizes = [2, 128], strides = [1, 1]} : vector<2x1024xf32> to vector<2x128xf32>
    %cst_51 = arith.constant dense<0xFF800000> : vector<2xf32>
    %273 = vector.multi_reduction <maximumf>, %272, %cst_51 [1] : vector<2x128xf32> to vector<2xf32>
    %274 = vector.shape_cast %273 : vector<2xf32> to vector<2x1xf32>
    %275 = vector.broadcast %274 : vector<2x1xf32> to vector<2x128xf32>
    %276 = arith.subf %272, %275 : vector<2x128xf32>
    %277 = math.exp %276 : vector<2x128xf32>
    %cst_52 = arith.constant dense<0.000000e+00> : vector<2xf32>
    %278 = vector.multi_reduction <add>, %277, %cst_52 [1] : vector<2x128xf32> to vector<2xf32>
    %279 = vector.shape_cast %278 : vector<2xf32> to vector<2x1xf32>
    %280 = math.log %279 : vector<2x1xf32>
    %281 = arith.addf %280, %274 : vector<2x1xf32>
    %c8_i32_53 = arith.constant 8 : i32
    %282 = arith.muli %arg0, %c8_i32_53 : i32
    %c6_i32 = arith.constant 6 : i32
    %283 = arith.addi %282, %c6_i32 : i32
    %284 = arith.index_cast %283 : i32 to index
    %285 = memref.load %arg1[%284] : memref<16xi32, #tpu.memory_space<smem>>
    %286 = arith.index_cast %283 : i32 to index
    %287 = memref.load %arg2[%286] : memref<16xi32, #tpu.memory_space<smem>>
    %c0_i32_54 = arith.constant 0 : i32
    %288 = vector.broadcast %c0_i32_54 : i32 to vector<2x128xi32>
    %289 = arith.cmpi eq, %7, %288 : vector<2x128xi32>
    %290 = vector.broadcast %285 : i32 to vector<2x128xi32>
    %291 = vector.broadcast %287 : i32 to vector<2x128xi32>
    %292 = arith.select %289, %290, %291 : vector<2x128xi1>, vector<2x128xi32>
    %293 = arith.cmpi eq, %6, %292 : vector<2x128xi32>
    %cst_55 = arith.constant 0.000000e+00 : f32
    %294 = vector.broadcast %cst_55 : f32 to vector<2x128xf32>
    %295 = arith.select %293, %272, %294 : vector<2x128xi1>, vector<2x128xf32>
    %cst_56 = arith.constant dense<0.000000e+00> : vector<2xf32>
    %296 = vector.multi_reduction <add>, %295, %cst_56 [1] : vector<2x128xf32> to vector<2xf32>
    %297 = vector.shape_cast %296 : vector<2xf32> to vector<2x1xf32>
    %298 = arith.subf %281, %297 : vector<2x1xf32>
    %299 = vector.broadcast %274 : vector<2x1xf32> to vector<2x128xf32>
    %300 = arith.cmpf oeq, %272, %299 : vector<2x128xf32>
    %c128_i32_57 = arith.constant 128 : i32
    %301 = vector.broadcast %c128_i32_57 : i32 to vector<2x128xi32>
    %302 = arith.select %300, %6, %301 : vector<2x128xi1>, vector<2x128xi32>
    %cst_58 = arith.constant dense<2147483647> : vector<2xi32>
    %303 = vector.multi_reduction <minsi>, %302, %cst_58 [1] : vector<2x128xi32> to vector<2xi32>
    %304 = vector.shape_cast %303 : vector<2xi32> to vector<2x1xi32>
    %305 = vector.extract_strided_slice %272 {offsets = [0, 0], sizes = [1, 128], strides = [1, 1]} : vector<2x128xf32> to vector<1x128xf32>
    %306 = vector.broadcast %4 : f32 to vector<1x128xf32>
    %307 = arith.addf %305, %306 : vector<1x128xf32>
    %308 = vector.extract_strided_slice %272 {offsets = [1, 0], sizes = [1, 128], strides = [1, 1]} : vector<2x128xf32> to vector<1x128xf32>
    %309 = vector.broadcast %5 : f32 to vector<1x128xf32>
    %310 = arith.addf %308, %309 : vector<1x128xf32>
    %311 = vector.extract_strided_slice %298 {offsets = [0, 0], sizes = [1, 1], strides = [1, 1]} : vector<2x1xf32> to vector<1x1xf32>
    %312 = vector.extract_strided_slice %298 {offsets = [1, 0], sizes = [1, 1], strides = [1, 1]} : vector<2x1xf32> to vector<1x1xf32>
    %313 = arith.addf %311, %312 : vector<1x1xf32>
    %314 = vector.extract_strided_slice %304 {offsets = [0, 0], sizes = [1, 1], strides = [1, 1]} : vector<2x1xi32> to vector<1x1xi32>
    %315 = vector.extract_strided_slice %304 {offsets = [1, 0], sizes = [1, 1], strides = [1, 1]} : vector<2x1xi32> to vector<1x1xi32>
    %316 = vector.extract_strided_slice %3 {offsets = [0, 896], sizes = [2, 128], strides = [1, 1]} : vector<2x1024xf32> to vector<2x128xf32>
    %cst_59 = arith.constant dense<0xFF800000> : vector<2xf32>
    %317 = vector.multi_reduction <maximumf>, %316, %cst_59 [1] : vector<2x128xf32> to vector<2xf32>
    %318 = vector.shape_cast %317 : vector<2xf32> to vector<2x1xf32>
    %319 = vector.broadcast %318 : vector<2x1xf32> to vector<2x128xf32>
    %320 = arith.subf %316, %319 : vector<2x128xf32>
    %321 = math.exp %320 : vector<2x128xf32>
    %cst_60 = arith.constant dense<0.000000e+00> : vector<2xf32>
    %322 = vector.multi_reduction <add>, %321, %cst_60 [1] : vector<2x128xf32> to vector<2xf32>
    %323 = vector.shape_cast %322 : vector<2xf32> to vector<2x1xf32>
    %324 = math.log %323 : vector<2x1xf32>
    %325 = arith.addf %324, %318 : vector<2x1xf32>
    %c8_i32_61 = arith.constant 8 : i32
    %326 = arith.muli %arg0, %c8_i32_61 : i32
    %c7_i32 = arith.constant 7 : i32
    %327 = arith.addi %326, %c7_i32 : i32
    %328 = arith.index_cast %327 : i32 to index
    %329 = memref.load %arg1[%328] : memref<16xi32, #tpu.memory_space<smem>>
    %330 = arith.index_cast %327 : i32 to index
    %331 = memref.load %arg2[%330] : memref<16xi32, #tpu.memory_space<smem>>
    %c0_i32_62 = arith.constant 0 : i32
    %332 = vector.broadcast %c0_i32_62 : i32 to vector<2x128xi32>
    %333 = arith.cmpi eq, %7, %332 : vector<2x128xi32>
    %334 = vector.broadcast %329 : i32 to vector<2x128xi32>
    %335 = vector.broadcast %331 : i32 to vector<2x128xi32>
    %336 = arith.select %333, %334, %335 : vector<2x128xi1>, vector<2x128xi32>
    %337 = arith.cmpi eq, %6, %336 : vector<2x128xi32>
    %cst_63 = arith.constant 0.000000e+00 : f32
    %338 = vector.broadcast %cst_63 : f32 to vector<2x128xf32>
    %339 = arith.select %337, %316, %338 : vector<2x128xi1>, vector<2x128xf32>
    %cst_64 = arith.constant dense<0.000000e+00> : vector<2xf32>
    %340 = vector.multi_reduction <add>, %339, %cst_64 [1] : vector<2x128xf32> to vector<2xf32>
    %341 = vector.shape_cast %340 : vector<2xf32> to vector<2x1xf32>
    %342 = arith.subf %325, %341 : vector<2x1xf32>
    %343 = vector.broadcast %318 : vector<2x1xf32> to vector<2x128xf32>
    %344 = arith.cmpf oeq, %316, %343 : vector<2x128xf32>
    %c128_i32_65 = arith.constant 128 : i32
    %345 = vector.broadcast %c128_i32_65 : i32 to vector<2x128xi32>
    %346 = arith.select %344, %6, %345 : vector<2x128xi1>, vector<2x128xi32>
    %cst_66 = arith.constant dense<2147483647> : vector<2xi32>
    %347 = vector.multi_reduction <minsi>, %346, %cst_66 [1] : vector<2x128xi32> to vector<2xi32>
    %348 = vector.shape_cast %347 : vector<2xi32> to vector<2x1xi32>
    %349 = vector.extract_strided_slice %316 {offsets = [0, 0], sizes = [1, 128], strides = [1, 1]} : vector<2x128xf32> to vector<1x128xf32>
    %350 = vector.broadcast %4 : f32 to vector<1x128xf32>
    %351 = arith.addf %349, %350 : vector<1x128xf32>
    %352 = vector.extract_strided_slice %316 {offsets = [1, 0], sizes = [1, 128], strides = [1, 1]} : vector<2x128xf32> to vector<1x128xf32>
    %353 = vector.broadcast %5 : f32 to vector<1x128xf32>
    %354 = arith.addf %352, %353 : vector<1x128xf32>
    %355 = vector.extract_strided_slice %342 {offsets = [0, 0], sizes = [1, 1], strides = [1, 1]} : vector<2x1xf32> to vector<1x1xf32>
    %356 = vector.extract_strided_slice %342 {offsets = [1, 0], sizes = [1, 1], strides = [1, 1]} : vector<2x1xf32> to vector<1x1xf32>
    %357 = arith.addf %355, %356 : vector<1x1xf32>
    %358 = vector.extract_strided_slice %348 {offsets = [0, 0], sizes = [1, 1], strides = [1, 1]} : vector<2x1xi32> to vector<1x1xi32>
    %359 = vector.extract_strided_slice %348 {offsets = [1, 0], sizes = [1, 1], strides = [1, 1]} : vector<2x1xi32> to vector<1x1xi32>
    %360 = tpu.concatenate %43, %87, %131, %175, %219, %263, %307, %351 in 0 : vector<1x128xf32>, vector<1x128xf32>, vector<1x128xf32>, vector<1x128xf32>, vector<1x128xf32>, vector<1x128xf32>, vector<1x128xf32>, vector<1x128xf32> -> vector<8x128xf32>
    %c0_67 = arith.constant 0 : index
    %c0_68 = arith.constant 0 : index
    %361 = vector.load %arg6[%c0_67, %c0_68] : memref<8x128xf32, #tpu.memory_space<vmem>>, vector<8x128xf32>
    tpu.vector_store %arg6[%c0_67, %c0_68], %360 {strides = array<i32>} : memref<8x128xf32, #tpu.memory_space<vmem>>, vector<8x128xf32>,
    %362 = tpu.concatenate %46, %90, %134, %178, %222, %266, %310, %354 in 0 : vector<1x128xf32>, vector<1x128xf32>, vector<1x128xf32>, vector<1x128xf32>, vector<1x128xf32>, vector<1x128xf32>, vector<1x128xf32>, vector<1x128xf32> -> vector<8x128xf32>
    %c0_69 = arith.constant 0 : index
    %c0_70 = arith.constant 0 : index
    %363 = vector.load %arg7[%c0_69, %c0_70] : memref<8x128xf32, #tpu.memory_space<vmem>>, vector<8x128xf32>
    tpu.vector_store %arg7[%c0_69, %c0_70], %362 {strides = array<i32>} : memref<8x128xf32, #tpu.memory_space<vmem>>, vector<8x128xf32>,
    %364 = tpu.concatenate %49, %93, %137, %181, %225, %269, %313, %357 in 0 : vector<1x1xf32>, vector<1x1xf32>, vector<1x1xf32>, vector<1x1xf32>, vector<1x1xf32>, vector<1x1xf32>, vector<1x1xf32>, vector<1x1xf32> -> vector<8x1xf32>
    %c0_71 = arith.constant 0 : index
    %c0_72 = arith.constant 0 : index
    %365 = vector.load %arg8[%c0_71, %c0_72] : memref<8x1xf32, #tpu.memory_space<vmem>>, vector<8x1xf32>
    tpu.vector_store %arg8[%c0_71, %c0_72], %364 {strides = array<i32>} : memref<8x1xf32, #tpu.memory_space<vmem>>, vector<8x1xf32>,
    %366 = tpu.concatenate %50, %94, %138, %182, %226, %270, %314, %358 in 0 : vector<1x1xi32>, vector<1x1xi32>, vector<1x1xi32>, vector<1x1xi32>, vector<1x1xi32>, vector<1x1xi32>, vector<1x1xi32>, vector<1x1xi32> -> vector<8x1xi32>
    %c0_73 = arith.constant 0 : index
    %c0_74 = arith.constant 0 : index
    %367 = vector.load %arg9[%c0_73, %c0_74] : memref<8x1xi32, #tpu.memory_space<vmem>>, vector<8x1xi32>
    tpu.vector_store %arg9[%c0_73, %c0_74], %366 {strides = array<i32>} : memref<8x1xi32, #tpu.memory_space<vmem>>, vector<8x1xi32>,
    %368 = tpu.concatenate %51, %95, %139, %183, %227, %271, %315, %359 in 0 : vector<1x1xi32>, vector<1x1xi32>, vector<1x1xi32>, vector<1x1xi32>, vector<1x1xi32>, vector<1x1xi32>, vector<1x1xi32>, vector<1x1xi32> -> vector<8x1xi32>
    %c0_75 = arith.constant 0 : index
    %c0_76 = arith.constant 0 : index
    %369 = vector.load %arg10[%c0_75, %c0_76] : memref<8x1xi32, #tpu.memory_space<vmem>>, vector<8x1xi32>
    tpu.vector_store %arg10[%c0_75, %c0_76], %368 {strides = array<i32>} : memref<8x1xi32, #tpu.memory_space<vmem>>, vector<8x1xi32>,
    return
  }
  func.func @transform_0(%arg0: i32, %arg1: memref<16xi32, #tpu.memory_space<smem>>, %arg2: memref<16xi32, #tpu.memory_space<smem>>) -> (i32, i32, i32) {
    %c0_i32 = arith.constant 0 : i32
    %c0_i32_0 = arith.constant 0 : i32
    %c0_i32_1 = arith.constant 0 : i32
    return %arg0, %c0_i32, %c0_i32_0 : i32, i32, i32
  }
  func.func @transform_1(%arg0: i32, %arg1: memref<16xi32, #tpu.memory_space<smem>>, %arg2: memref<16xi32, #tpu.memory_space<smem>>) -> (i32, i32) {
    %c0_i32 = arith.constant 0 : i32
    %c0_i32_0 = arith.constant 0 : i32
    %c0_i32_1 = arith.constant 0 : i32
    return %c0_i32, %c0_i32_0 : i32, i32
  }
  func.func @transform_2(%arg0: i32, %arg1: memref<16xi32, #tpu.memory_space<smem>>, %arg2: memref<16xi32, #tpu.memory_space<smem>>) -> i32 {
    %c0_i32 = arith.constant 0 : i32
    %c0_i32_0 = arith.constant 0 : i32
    return %c0_i32 : i32
  }
  func.func @transform_3(%arg0: i32, %arg1: memref<16xi32, #tpu.memory_space<smem>>, %arg2: memref<16xi32, #tpu.memory_space<smem>>) -> (i32, i32) {
    %c0_i32 = arith.constant 0 : i32
    %c0_i32_0 = arith.constant 0 : i32
    return %arg0, %c0_i32 : i32, i32
  }
  func.func @transform_4(%arg0: i32, %arg1: memref<16xi32, #tpu.memory_space<smem>>, %arg2: memref<16xi32, #tpu.memory_space<smem>>) -> (i32, i32) {
    %c0_i32 = arith.constant 0 : i32
    %c0_i32_0 = arith.constant 0 : i32
    return %arg0, %c0_i32 : i32, i32
  }
  func.func @transform_5(%arg0: i32, %arg1: memref<16xi32, #tpu.memory_space<smem>>, %arg2: memref<16xi32, #tpu.memory_space<smem>>) -> (i32, i32) {
    %c0_i32 = arith.constant 0 : i32
    %c0_i32_0 = arith.constant 0 : i32
    return %arg0, %c0_i32 : i32, i32
  }
  func.func @transform_6(%arg0: i32, %arg1: memref<16xi32, #tpu.memory_space<smem>>, %arg2: memref<16xi32, #tpu.memory_space<smem>>) -> (i32, i32) {
    %c0_i32 = arith.constant 0 : i32
    %c0_i32_0 = arith.constant 0 : i32
    return %arg0, %c0_i32 : i32, i32
  }
  func.func @transform_7(%arg0: i32, %arg1: memref<16xi32, #tpu.memory_space<smem>>, %arg2: memref<16xi32, #tpu.memory_space<smem>>) -> (i32, i32) {
    %c0_i32 = arith.constant 0 : i32
    %c0_i32_0 = arith.constant 0 : i32
    return %arg0, %c0_i32 : i32, i32
  }
}

</mosaic_0001>

<llo_original>
// kernel: tpu_custom_call.1
$region0: #{tpu_custom_call.1}
  #allocation0 [shape = 'u32[]', space=smem, size = 0x4, offset = 0x4, fixed_abs, tag = 'smem constant byte address 0x4 - core index']
  #allocation1 [shape = 'u32[144,128]{1,0:T(1,128)}', space=vmem, size = 0x12000, scoped, tag = 'internal scratch']
  #allocation2 [shape = 's32[1]{0}', space=sflag, size = 0x4, scoped, tag = 'scoped memory for tpu_custom_call.1']
  #allocation3 [shape = 'u8[512]{0}', space=smem, size = 0x200, scoped, tag = 'prefetched SMEM operand 0']
  #allocation4 [shape = 'u8[512]{0}', space=smem, size = 0x200, scoped, tag = 'prefetched SMEM operand 1']
  %s0 = inlined_call_operand.hbm [shape: s32[16], index: 0, kind: input, shape index: {}]
  %s1 = inlined_call_operand.vmem [shape: s32[16], index: 1, kind: input, shape index: {}]
  %s2 = inlined_call_operand.hbm [shape: bf16[16,128,256], index: 2, kind: input, shape index: {}]
  %s3 = inlined_call_operand.vmem [shape: bf16[2,256], index: 3, kind: input, shape index: {}]
  %s4 = inlined_call_operand.vmem [shape: f32[2], index: 4, kind: input, shape index: {}]
  %s5 = inlined_call_operand.hbm [shape: f32[16,128], index: 5, kind: output, shape index: {0}]
  %s6 = inlined_call_operand.hbm [shape: f32[16,128], index: 6, kind: output, shape index: {1}]
  %s7 = inlined_call_operand.vmem [shape: f32[16,1], index: 7, kind: output, shape index: {2}]
  %s8 = inlined_call_operand.vmem [shape: s32[16,1], index: 8, kind: output, shape index: {3}]
  %s9 = inlined_call_operand.vmem [shape: s32[16,1], index: 9, kind: output, shape index: {4}]
  %10 = xla_tuple %s5, %s6, %s7, %s8, %s9
  %s11 = sld [smem:[#allocation0]]
  $region85: #{tpu_custom_call.1} parent=0
    _
  %s13 = ssub.s32 1, %s11
  %s14 = scalar_select 0, %s13, %s11
  %16 = dma.hbm_to_smem %s0, 16, [#allocation3], [#allocation2]
  %s17 = sshll.u32 %s1, 4
  %s18 = int_to_ptr.vmem [resolvable:$true] %s17
  %20 = dma.vmem_to_smem %s18, 16, [#allocation4], [#allocation2]
  %21 = dma.done [#allocation2], 32
  %22 = sfence
  $region1: #{tpu_custom_call.1} parent=0
    #allocation5 [shape = 'u8[1048576]{0}', space=vmem, size = 0x100000, scoped, tag = 'input window, operand 2']
    #allocation6 [shape = 's32[2]{0}', space=sflag, size = 0x8, scoped, tag = 'scoped memory for tpu_custom_call.1']
    #allocation7 [shape = 's32[2]{0}', space=sflag, size = 0x8, scoped, tag = 'scoped memory for tpu_custom_call.1']
    #allocation8 [shape = 's32[2]{0}', space=sflag, size = 0x8, scoped, tag = 'scoped memory for tpu_custom_call.1']
    #allocation9 [shape = 'u8[512]{0}', space=smem, size = 0x200, scoped, tag = 'input window, operand 4, single buffered']
    #allocation10 [shape = 'u8[8192]{0}', space=vmem, size = 0x2000, scoped, tag = 'output window, operand 0']
    #allocation11 [shape = 'u8[8192]{0}', space=vmem, size = 0x2000, scoped, tag = 'output window, operand 1']
    #allocation12 [shape = 's32[2]{0}', space=sflag, size = 0x8, scoped, tag = 'scoped memory for tpu_custom_call.1']
    %23 = vsyncpa [#allocation6], 0
    %s24 = scalar_lea.sflag [#allocation6], 1
    %25 = vsyncpa %s24, 0
    %26 = vsyncpa [#allocation8], 0
    %27 = vsyncpa [#allocation7], 0
    %s28 = scalar_lea.sflag [#allocation7], 1
    %29 = vsyncpa %s28, 0
    %30 = vsyncpa [#allocation12], 0
    %s31 = scalar_lea.sflag [#allocation12], 1
    %32 = vsyncpa %s31, 0
    loop: start=0, step=1, limit=4
    $region2: #{tpu_custom_call.1} parent=1 // loop_pre_header
      _
    $region3: #{tpu_custom_call.1} parent=1 // loop_header
      %s34 = sphi 0, %s38
      %p35 = scmp.ge.s32.totalorder %s34, 4
      %s44 = sphi 0, %s46
      %s47 = sphi 0, %s44
      %s48 = sphi 0, %s47
      %s64 = sphi 0, %s48
      %s68 = sphi 0, %s68
      %s70 = sphi 0, %s68
      %s71 = sphi 0, %s70
      %s85 = sphi 0, %s71
      %s89 = sphi 0, %s89
      %s91 = sphi 0, %s89
      %s92 = sphi 0, %s91
      %s106 = sphi 0, %s92
      %s112 = sphi 0, %s114
      %s115 = sphi 0, %s112
      %s116 = sphi 0, %s115
      %s132 = sphi 0, %s116
      %s138 = sphi 0, %s140
      %s141 = sphi 0, %s138
      %s142 = sphi 0, %s141
      %s158 = sphi 0, %s142
      %s164 = sphi 0, %s166
      %s167 = sphi 0, %s164
      %s168 = sphi 0, %s167
      %s184 = sphi 0, %s168
      %s190 = sphi 0, %s192
      %s193 = sphi 0, %s190
      %s194 = sphi 0, %s193
      %s210 = sphi 0, %s194
      %s216 = sphi 0, %s218
      %s219 = sphi 0, %s216
      %s220 = sphi 0, %s219
      %s236 = sphi 0, %s220
    $region4: #{tpu_custom_call.1} parent=1 // loop_header_branch
      %37 = sbr.rel (%p35) target = $region8
    $region5: #{tpu_custom_call.1} parent=1 // loop_body
      %s39 = ssub.s32 %s34, 1
      %s40 = ssub.s32 %s34, 2
      %s41 = sadd.s32 %s34, 1
      %s42 = ssub.s32 %s34, %s41
      %p43 = scmp.eq.s32.totalorder %s42, 0
      %s45 = sadd.s32 %s44, 1
      %s46 = scalar_select %p43, %s44, %s45
      %p49 = pneg %p43
      %p50 = scmp.eq.s32.totalorder %s34, 1
      %p51 = por %p49, %p50
      %p52 = scmp.ne.s32.totalorder %s44, %s47
      %p53 = scmp.eq.s32.totalorder %s34, 0
      %p54 = por %p52, %p53
      %p55 = scmp.ne.s32.totalorder %s44, %s47
      %p56 = scmp.eq.s32.totalorder %s39, 1
      %p57 = por %p55, %p56
      %p58 = scmp.ne.s32.totalorder %s47, %s48
      %p59 = scmp.eq.s32.totalorder %s39, 0
      %p60 = por %p58, %p59
      %p61 = scmp.ne.s32.totalorder %s47, %s48
      %p62 = scmp.eq.s32.totalorder %s40, 1
      %p63 = por %p61, %p62
      %p65 = scmp.ne.s32.totalorder %s48, %s64
      %p66 = scmp.eq.s32.totalorder %s40, 0
      %p67 = por %p65, %p66
      %s69 = sadd.s32 %s68, 1
      %p72 = scmp.eq.s32.totalorder %s34, 1
      %p73 = scmp.ne.s32.totalorder %s68, %s70
      %p74 = scmp.eq.s32.totalorder %s34, 0
      %p75 = por %p73, %p74
      %p76 = scmp.ne.s32.totalorder %s68, %s70
      %p77 = scmp.eq.s32.totalorder %s39, 1
      %p78 = por %p76, %p77
      %p79 = scmp.ne.s32.totalorder %s70, %s71
      %p80 = scmp.eq.s32.totalorder %s39, 0
      %p81 = por %p79, %p80
      %p82 = scmp.ne.s32.totalorder %s70, %s71
      %p83 = scmp.eq.s32.totalorder %s40, 1
      %p84 = por %p82, %p83
      %p86 = scmp.ne.s32.totalorder %s71, %s85
      %p87 = scmp.eq.s32.totalorder %s40, 0
      %p88 = por %p86, %p87
      %s90 = sadd.s32 %s89, 1
      %p93 = scmp.eq.s32.totalorder %s34, 1
      %p94 = scmp.ne.s32.totalorder %s89, %s91
      %p95 = scmp.eq.s32.totalorder %s34, 0
      %p96 = por %p94, %p95
      %p97 = scmp.ne.s32.totalorder %s89, %s91
      %p98 = scmp.eq.s32.totalorder %s39, 1
      %p99 = por %p97, %p98
      %p100 = scmp.ne.s32.totalorder %s91, %s92
      %p101 = scmp.eq.s32.totalorder %s39, 0
      %p102 = por %p100, %p101
      %p103 = scmp.ne.s32.totalorder %s91, %s92
      %p104 = scmp.eq.s32.totalorder %s40, 1
      %p105 = por %p103, %p104
      %p107 = scmp.ne.s32.totalorder %s92, %s106
      %p108 = scmp.eq.s32.totalorder %s40, 0
      %p109 = por %p107, %p108
      %s110 = ssub.s32 %s34, %s41
      %p111 = scmp.eq.s32.totalorder %s110, 0
      %s113 = sadd.s32 %s112, 1
      %s114 = scalar_select %p111, %s112, %s113
      %p117 = pneg %p111
      %p118 = scmp.eq.s32.totalorder %s34, 1
      %p119 = por %p117, %p118
      %p120 = scmp.ne.s32.totalorder %s112, %s115
      %p121 = scmp.eq.s32.totalorder %s34, 0
      %p122 = por %p120, %p121
      %p123 = scmp.ne.s32.totalorder %s112, %s115
      %p124 = scmp.eq.s32.totalorder %s39, 1
      %p125 = por %p123, %p124
      %p126 = scmp.ne.s32.totalorder %s115, %s116
      %p127 = scmp.eq.s32.totalorder %s39, 0
      %p128 = por %p126, %p127
      %p129 = scmp.ne.s32.totalorder %s115, %s116
      %p130 = scmp.eq.s32.totalorder %s40, 1
      %p131 = por %p129, %p130
      %p133 = scmp.ne.s32.totalorder %s116, %s132
      %p134 = scmp.eq.s32.totalorder %s40, 0
      %p135 = por %p133, %p134
      %s136 = ssub.s32 %s34, %s41
      %p137 = scmp.eq.s32.totalorder %s136, 0
      %s139 = sadd.s32 %s138, 1
      %s140 = scalar_select %p137, %s138, %s139
      %p143 = pneg %p137
      %p144 = scmp.eq.s32.totalorder %s34, 1
      %p145 = por %p143, %p144
      %p146 = scmp.ne.s32.totalorder %s138, %s141
      %p147 = scmp.eq.s32.totalorder %s34, 0
      %p148 = por %p146, %p147
      %p149 = scmp.ne.s32.totalorder %s138, %s141
      %p150 = scmp.eq.s32.totalorder %s39, 1
      %p151 = por %p149, %p150
      %p152 = scmp.ne.s32.totalorder %s141, %s142
      %p153 = scmp.eq.s32.totalorder %s39, 0
      %p154 = por %p152, %p153
      %p155 = scmp.ne.s32.totalorder %s141, %s142
      %p156 = scmp.eq.s32.totalorder %s40, 1
      %p157 = por %p155, %p156
      %p159 = scmp.ne.s32.totalorder %s142, %s158
      %p160 = scmp.eq.s32.totalorder %s40, 0
      %p161 = por %p159, %p160
      %s162 = ssub.s32 %s34, %s41
      %p163 = scmp.eq.s32.totalorder %s162, 0
      %s165 = sadd.s32 %s164, 1
      %s166 = scalar_select %p163, %s164, %s165
      %p169 = pneg %p163
      %p170 = scmp.eq.s32.totalorder %s34, 1
      %p171 = por %p169, %p170
      %p172 = scmp.ne.s32.totalorder %s164, %s167
      %p173 = scmp.eq.s32.totalorder %s34, 0
      %p174 = por %p172, %p173
      %p175 = scmp.ne.s32.totalorder %s164, %s167
      %p176 = scmp.eq.s32.totalorder %s39, 1
      %p177 = por %p175, %p176
      %p178 = scmp.ne.s32.totalorder %s167, %s168
      %p179 = scmp.eq.s32.totalorder %s39, 0
      %p180 = por %p178, %p179
      %p181 = scmp.ne.s32.totalorder %s167, %s168
      %p182 = scmp.eq.s32.totalorder %s40, 1
      %p183 = por %p181, %p182
      %p185 = scmp.ne.s32.totalorder %s168, %s184
      %p186 = scmp.eq.s32.totalorder %s40, 0
      %p187 = por %p185, %p186
      %s188 = ssub.s32 %s34, %s41
      %p189 = scmp.eq.s32.totalorder %s188, 0
      %s191 = sadd.s32 %s190, 1
      %s192 = scalar_select %p189, %s190, %s191
      %p195 = pneg %p189
      %p196 = scmp.eq.s32.totalorder %s34, 1
      %p197 = por %p195, %p196
      %p198 = scmp.ne.s32.totalorder %s190, %s193
      %p199 = scmp.eq.s32.totalorder %s34, 0
      %p200 = por %p198, %p199
      %p201 = scmp.ne.s32.totalorder %s190, %s193
      %p202 = scmp.eq.s32.totalorder %s39, 1
      %p203 = por %p201, %p202
      %p204 = scmp.ne.s32.totalorder %s193, %s194
      %p205 = scmp.eq.s32.totalorder %s39, 0
      %p206 = por %p204, %p205
      %p207 = scmp.ne.s32.totalorder %s193, %s194
      %p208 = scmp.eq.s32.totalorder %s40, 1
      %p209 = por %p207, %p208
      %p211 = scmp.ne.s32.totalorder %s194, %s210
      %p212 = scmp.eq.s32.totalorder %s40, 0
      %p213 = por %p211, %p212
      %s214 = ssub.s32 %s34, %s41
      %p215 = scmp.eq.s32.totalorder %s214, 0
      %s217 = sadd.s32 %s216, 1
      %s218 = scalar_select %p215, %s216, %s217
      %p221 = pneg %p215
      %p222 = scmp.eq.s32.totalorder %s34, 1
      %p223 = por %p221, %p222
      %p224 = scmp.ne.s32.totalorder %s216, %s219
      %p225 = scmp.eq.s32.totalorder %s34, 0
      %p226 = por %p224, %p225
      %p227 = scmp.ne.s32.totalorder %s216, %s219
      %p228 = scmp.eq.s32.totalorder %s39, 1
      %p229 = por %p227, %p228
      %p230 = scmp.ne.s32.totalorder %s219, %s220
      %p231 = scmp.eq.s32.totalorder %s39, 0
      %p232 = por %p230, %p231
      %p233 = scmp.ne.s32.totalorder %s219, %s220
      %p234 = scmp.eq.s32.totalorder %s40, 1
      %p235 = por %p233, %p234
      %p237 = scmp.ne.s32.totalorder %s220, %s236
      %p238 = scmp.eq.s32.totalorder %s40, 0
      %p239 = por %p237, %p238
      %p240 = scmp.le.s32.totalorder 1, %s34
      %p241 = scmp.lt.s32.totalorder %s34, 3
      %p242 = pnand %p240, %p241
      %p243 = pneg %p242
      // Predicated region
      $region9: #{tpu_custom_call.1} parent=5 // pred_check
        _
      $region10: #{tpu_custom_call.1} parent=5 // pred_check_branch
        %245 = sbr.rel (%p242) target = $region12
      $region11: #{tpu_custom_call.1} parent=5 // pred_region
        %s246 = ssub.s32 %s34, 1
        // Predicated region
        $region13: #{tpu_custom_call.1} parent=11 // pred_check
          %p247 = pneg %p81
        $region14: #{tpu_custom_call.1} parent=11 // pred_check_branch
          %249 = sbr.rel (%p247) target = $region16
        $region15: #{tpu_custom_call.1} parent=11 // pred_region
          _
        $region16: #{tpu_custom_call.1} parent=11 // pred_fallthru
          _
        // Predicated region
        $region17: #{tpu_custom_call.1} parent=11 // pred_check
          %p250 = pneg %p102
        $region18: #{tpu_custom_call.1} parent=11 // pred_check_branch
          %252 = sbr.rel (%p250) target = $region20
        $region19: #{tpu_custom_call.1} parent=11 // pred_region
          %s254 = ssub.s32 16, 16
          %255 = vsyncadd [#allocation8], %s254
          %s257 = sshll.u32 %s4, 4
          %s258 = int_to_ptr.vmem [resolvable:$true] %s257
          %260 = dma.vmem_to_smem %s258, 16, [#allocation9], [#allocation8]
        $region20: #{tpu_custom_call.1} parent=11 // pred_fallthru
          _
      $region12: #{tpu_custom_call.1} parent=5 // pred_fallthru
        _
      %p261 = scmp.lt.s32.totalorder %s34, 2
      // Predicated region
      $region21: #{tpu_custom_call.1} parent=5 // pred_check
        %p262 = pneg %p261
      $region22: #{tpu_custom_call.1} parent=5 // pred_check_branch
        %264 = sbr.rel (%p262) target = $region24
      $region23: #{tpu_custom_call.1} parent=5 // pred_region
        // Predicated region
        $region25: #{tpu_custom_call.1} parent=23 // pred_check
          %p265 = pneg %p54
        $region26: #{tpu_custom_call.1} parent=23 // pred_check_branch
          %267 = sbr.rel (%p265) target = $region28
        $region27: #{tpu_custom_call.1} parent=23 // pred_region
          %s268 = sand.u32 %s44, 1
          %s269 = scalar_lea.sflag [#allocation6], %s268
          %s270 = sand.u32 %s44, 1
          %s271 = smul.addr %s270, 1024
          %s272 = scalar_lea.vmem [#allocation5], %s271
          %s273 = smul.u32 8, %s34
          %s275 = ssub.s32 16384, 16384
          %276 = vsyncadd %s269, %s275
          %s277 = smul.addr %s273, 32
          %s278 = smul.addr %s277, 64
          %s279 = scalar_lea.hbm %s2, %s278
          %s280 = sshll.u32 %s272, 4
          %s281 = int_to_ptr.vmem [resolvable:$true] %s280
          %286 = dma.hbm_to_vmem [thread:$0]  %s279, 16384, %s281, %s269, 128, 128, 8
        $region28: #{tpu_custom_call.1} parent=23 // pred_fallthru
          _
      $region24: #{tpu_custom_call.1} parent=5 // pred_fallthru
        _
      %p287 = scmp.le.s32.totalorder 1, %s34
      %p288 = scmp.lt.s32.totalorder %s34, 3
      %p289 = pnand %p287, %p288
      %p290 = pneg %p289
      // Predicated region
      $region29: #{tpu_custom_call.1} parent=5 // pred_check
        _
      $region30: #{tpu_custom_call.1} parent=5 // pred_check_branch
        %292 = sbr.rel (%p289) target = $region32
      $region31: #{tpu_custom_call.1} parent=5 // pred_region
        %s293 = ssub.s32 %s34, 1
        %s294 = sand.u32 %s47, 1
        %s295 = scalar_lea.sflag [#allocation6], %s294
        %s296 = sand.u32 %s47, 1
        %s297 = smul.addr %s296, 1024
        %s298 = scalar_lea.vmem [#allocation5], %s297
        // Predicated region
        $region33: #{tpu_custom_call.1} parent=31 // pred_check
          %p299 = pneg %p60
        $region34: #{tpu_custom_call.1} parent=31 // pred_check_branch
          %301 = sbr.rel (%p299) target = $region36
        $region35: #{tpu_custom_call.1} parent=31 // pred_region
          %302 = dma.done %s295, 16384
        $region36: #{tpu_custom_call.1} parent=31 // pred_fallthru
          _
        // Predicated region
        $region37: #{tpu_custom_call.1} parent=31 // pred_check
          %p303 = pneg %p102
        $region38: #{tpu_custom_call.1} parent=31 // pred_check_branch
          %305 = sbr.rel (%p303) target = $region40
        $region39: #{tpu_custom_call.1} parent=31 // pred_region
          %306 = dma.done [#allocation8], 16
        $region40: #{tpu_custom_call.1} parent=31 // pred_fallthru
          _
        %307 = sfence
        %s308 = sand.u32 %s47, 1
        %s309 = scalar_lea.sflag [#allocation6], %s308
        %s310 = sand.u32 %s47, 1
        %s311 = smul.addr %s310, 1024
        %s312 = scalar_lea.vmem [#allocation5], %s311
        %p313 = pneg %p60
        %p314 = pneg %p57
        %p315 = pneg %p81
        %p316 = pneg %p78
        %p317 = pneg %p102
        %p318 = pneg %p99
        %p319 = pneg %p128
        %p320 = pneg %p125
        %s321 = sand.u32 %s115, 1
        %s322 = scalar_lea.sflag [#allocation7], %s321
        %s323 = sand.u32 %s115, 1
        %s324 = smul.addr %s323, 8
        %s325 = scalar_lea.vmem [#allocation10], %s324
        %p326 = pneg %p154
        %p327 = pneg %p151
        %s328 = sand.u32 %s141, 1
        %s329 = scalar_lea.sflag [#allocation12], %s328
        %s330 = sand.u32 %s141, 1
        %s331 = smul.addr %s330, 8
        %s332 = scalar_lea.vmem [#allocation11], %s331
        %p333 = pneg %p180
        %p334 = pneg %p177
        %p335 = scmp.lt.s32.totalorder %s39, 1
        %s336 = scalar_select %p335, %s39, 1
        %s337 = smul.addr %s336, 8
        %s338 = scalar_lea.vmem %s7, %s337
        %p339 = pneg %p206
        %p340 = pneg %p203
        %p341 = scmp.lt.s32.totalorder %s39, 1
        %s342 = scalar_select %p341, %s39, 1
        %s343 = smul.addr %s342, 8
        %s344 = scalar_lea.vmem %s8, %s343
        %p345 = pneg %p232
        %p346 = pneg %p229
        %p347 = scmp.lt.s32.totalorder %s39, 1
        %s348 = scalar_select %p347, %s39, 1
        %s349 = smul.addr %s348, 8
        %s350 = scalar_lea.vmem %s9, %s349
        %s351 = smul.u32 8, %s39
        %p352 = scmp.lt.s32.totalorder %s39, 1
        %s353 = scalar_select %p352, %s39, 1
        %s354 = smul.addr %s353, 8
        %s355 = scalar_lea.vmem %s7, %s354
        %p356 = scmp.lt.s32.totalorder %s39, 1
        %s357 = scalar_select %p356, %s39, 1
        %s358 = smul.addr %s357, 8
        %s359 = scalar_lea.vmem %s8, %s358
        %p360 = scmp.lt.s32.totalorder %s39, 1
        %s361 = scalar_select %p360, %s39, 1
        %s362 = smul.addr %s361, 8
        %s363 = scalar_lea.vmem %s9, %s362
        %v364 = vld [vmem:[%s298] sm:$0xff]
        %v365 = vld [vmem:[%s298 + $0x8] sm:$0xff]
        %v366 = vld [vmem:[%s298 + $0x10] sm:$0xff]
        %v367 = vld [vmem:[%s298 + $0x18] sm:$0xff]
        %v368 = vld [vmem:[%s298 + $0x20] sm:$0xff]
        %v369 = vld [vmem:[%s298 + $0x28] sm:$0xff]
        %v370 = vld [vmem:[%s298 + $0x30] sm:$0xff]
        %v371 = vld [vmem:[%s298 + $0x38] sm:$0xff]
        %v372 = vld [vmem:[%s298 + $0x40] sm:$0xff]
        %v373 = vld [vmem:[%s298 + $0x48] sm:$0xff]
        %v374 = vld [vmem:[%s298 + $0x50] sm:$0xff]
        %v375 = vld [vmem:[%s298 + $0x58] sm:$0xff]
        %v376 = vld [vmem:[%s298 + $0x60] sm:$0xff]
        %v377 = vld [vmem:[%s298 + $0x68] sm:$0xff]
        %v378 = vld [vmem:[%s298 + $0x70] sm:$0xff]
        %v379 = vld [vmem:[%s298 + $0x78] sm:$0xff]
        %v380 = vld [vmem:[%s298 + $0x80] sm:$0xff]
        %v381 = vld [vmem:[%s298 + $0x88] sm:$0xff]
        %v382 = vld [vmem:[%s298 + $0x90] sm:$0xff]
        %v383 = vld [vmem:[%s298 + $0x98] sm:$0xff]
        %v384 = vld [vmem:[%s298 + $0xa0] sm:$0xff]
        %v385 = vld [vmem:[%s298 + $0xa8] sm:$0xff]
        %v386 = vld [vmem:[%s298 + $0xb0] sm:$0xff]
        %v387 = vld [vmem:[%s298 + $0xb8] sm:$0xff]
        %v388 = vld [vmem:[%s298 + $0xc0] sm:$0xff]
        %v389 = vld [vmem:[%s298 + $0xc8] sm:$0xff]
        %v390 = vld [vmem:[%s298 + $0xd0] sm:$0xff]
        %v391 = vld [vmem:[%s298 + $0xd8] sm:$0xff]
        %v392 = vld [vmem:[%s298 + $0xe0] sm:$0xff]
        %v393 = vld [vmem:[%s298 + $0xe8] sm:$0xff]
        %v394 = vld [vmem:[%s298 + $0xf0] sm:$0xff]
        %v395 = vld [vmem:[%s298 + $0xf8] sm:$0xff]
        %v396 = vld [vmem:[%s298 + $0x100] sm:$0xff]
        %v397 = vld [vmem:[%s298 + $0x108] sm:$0xff]
        %v398 = vld [vmem:[%s298 + $0x110] sm:$0xff]
        %v399 = vld [vmem:[%s298 + $0x118] sm:$0xff]
        %v400 = vld [vmem:[%s298 + $0x120] sm:$0xff]
        %v401 = vld [vmem:[%s298 + $0x128] sm:$0xff]
        %v402 = vld [vmem:[%s298 + $0x130] sm:$0xff]
        %v403 = vld [vmem:[%s298 + $0x138] sm:$0xff]
        %v404 = vld [vmem:[%s298 + $0x140] sm:$0xff]
        %v405 = vld [vmem:[%s298 + $0x148] sm:$0xff]
        %v406 = vld [vmem:[%s298 + $0x150] sm:$0xff]
        %v407 = vld [vmem:[%s298 + $0x158] sm:$0xff]
        %v408 = vld [vmem:[%s298 + $0x160] sm:$0xff]
        %v409 = vld [vmem:[%s298 + $0x168] sm:$0xff]
        %v410 = vld [vmem:[%s298 + $0x170] sm:$0xff]
        %v411 = vld [vmem:[%s298 + $0x178] sm:$0xff]
        %v412 = vld [vmem:[%s298 + $0x180] sm:$0xff]
        %v413 = vld [vmem:[%s298 + $0x188] sm:$0xff]
        %v414 = vld [vmem:[%s298 + $0x190] sm:$0xff]
        %v415 = vld [vmem:[%s298 + $0x198] sm:$0xff]
        %v416 = vld [vmem:[%s298 + $0x1a0] sm:$0xff]
        %v417 = vld [vmem:[%s298 + $0x1a8] sm:$0xff]
        %v418 = vld [vmem:[%s298 + $0x1b0] sm:$0xff]
        %v419 = vld [vmem:[%s298 + $0x1b8] sm:$0xff]
        %v420 = vld [vmem:[%s298 + $0x1c0] sm:$0xff]
        %v421 = vld [vmem:[%s298 + $0x1c8] sm:$0xff]
        %v422 = vld [vmem:[%s298 + $0x1d0] sm:$0xff]
        %v423 = vld [vmem:[%s298 + $0x1d8] sm:$0xff]
        %v424 = vld [vmem:[%s298 + $0x1e0] sm:$0xff]
        %v425 = vld [vmem:[%s298 + $0x1e8] sm:$0xff]
        %v426 = vld [vmem:[%s298 + $0x1f0] sm:$0xff]
        %v427 = vld [vmem:[%s298 + $0x1f8] sm:$0xff]
        %v428 = vld [vmem:[%s298 + $0x200] sm:$0xff]
        %v429 = vld [vmem:[%s298 + $0x208] sm:$0xff]
        %v430 = vld [vmem:[%s298 + $0x210] sm:$0xff]
        %v431 = vld [vmem:[%s298 + $0x218] sm:$0xff]
        %v432 = vld [vmem:[%s298 + $0x220] sm:$0xff]
        %v433 = vld [vmem:[%s298 + $0x228] sm:$0xff]
        %v434 = vld [vmem:[%s298 + $0x230] sm:$0xff]
        %v435 = vld [vmem:[%s298 + $0x238] sm:$0xff]
        %v436 = vld [vmem:[%s298 + $0x240] sm:$0xff]
        %v437 = vld [vmem:[%s298 + $0x248] sm:$0xff]
        %v438 = vld [vmem:[%s298 + $0x250] sm:$0xff]
        %v439 = vld [vmem:[%s298 + $0x258] sm:$0xff]
        %v440 = vld [vmem:[%s298 + $0x260] sm:$0xff]
        %v441 = vld [vmem:[%s298 + $0x268] sm:$0xff]
        %v442 = vld [vmem:[%s298 + $0x270] sm:$0xff]
        %v443 = vld [vmem:[%s298 + $0x278] sm:$0xff]
        %v444 = vld [vmem:[%s298 + $0x280] sm:$0xff]
        %v445 = vld [vmem:[%s298 + $0x288] sm:$0xff]
        %v446 = vld [vmem:[%s298 + $0x290] sm:$0xff]
        %v447 = vld [vmem:[%s298 + $0x298] sm:$0xff]
        %v448 = vld [vmem:[%s298 + $0x2a0] sm:$0xff]
        %v449 = vld [vmem:[%s298 + $0x2a8] sm:$0xff]
        %v450 = vld [vmem:[%s298 + $0x2b0] sm:$0xff]
        %v451 = vld [vmem:[%s298 + $0x2b8] sm:$0xff]
        %v452 = vld [vmem:[%s298 + $0x2c0] sm:$0xff]
        %v453 = vld [vmem:[%s298 + $0x2c8] sm:$0xff]
        %v454 = vld [vmem:[%s298 + $0x2d0] sm:$0xff]
        %v455 = vld [vmem:[%s298 + $0x2d8] sm:$0xff]
        %v456 = vld [vmem:[%s298 + $0x2e0] sm:$0xff]
        %v457 = vld [vmem:[%s298 + $0x2e8] sm:$0xff]
        %v458 = vld [vmem:[%s298 + $0x2f0] sm:$0xff]
        %v459 = vld [vmem:[%s298 + $0x2f8] sm:$0xff]
        %v460 = vld [vmem:[%s298 + $0x300] sm:$0xff]
        %v461 = vld [vmem:[%s298 + $0x308] sm:$0xff]
        %v462 = vld [vmem:[%s298 + $0x310] sm:$0xff]
        %v463 = vld [vmem:[%s298 + $0x318] sm:$0xff]
        %v464 = vld [vmem:[%s298 + $0x320] sm:$0xff]
        %v465 = vld [vmem:[%s298 + $0x328] sm:$0xff]
        %v466 = vld [vmem:[%s298 + $0x330] sm:$0xff]
        %v467 = vld [vmem:[%s298 + $0x338] sm:$0xff]
        %v468 = vld [vmem:[%s298 + $0x340] sm:$0xff]
        %v469 = vld [vmem:[%s298 + $0x348] sm:$0xff]
        %v470 = vld [vmem:[%s298 + $0x350] sm:$0xff]
        %v471 = vld [vmem:[%s298 + $0x358] sm:$0xff]
        %v472 = vld [vmem:[%s298 + $0x360] sm:$0xff]
        %v473 = vld [vmem:[%s298 + $0x368] sm:$0xff]
        %v474 = vld [vmem:[%s298 + $0x370] sm:$0xff]
        %v475 = vld [vmem:[%s298 + $0x378] sm:$0xff]
        %v476 = vld [vmem:[%s298 + $0x380] sm:$0xff]
        %v477 = vld [vmem:[%s298 + $0x388] sm:$0xff]
        %v478 = vld [vmem:[%s298 + $0x390] sm:$0xff]
        %v479 = vld [vmem:[%s298 + $0x398] sm:$0xff]
        %v480 = vld [vmem:[%s298 + $0x3a0] sm:$0xff]
        %v481 = vld [vmem:[%s298 + $0x3a8] sm:$0xff]
        %v482 = vld [vmem:[%s298 + $0x3b0] sm:$0xff]
        %v483 = vld [vmem:[%s298 + $0x3b8] sm:$0xff]
        %v484 = vld [vmem:[%s298 + $0x3c0] sm:$0xff]
        %v485 = vld [vmem:[%s298 + $0x3c8] sm:$0xff]
        %v486 = vld [vmem:[%s298 + $0x3d0] sm:$0xff]
        %v487 = vld [vmem:[%s298 + $0x3d8] sm:$0xff]
        %v488 = vld [vmem:[%s298 + $0x3e0] sm:$0xff]
        %v489 = vld [vmem:[%s298 + $0x3e8] sm:$0xff]
        %v490 = vld [vmem:[%s298 + $0x3f0] sm:$0xff]
        %v491 = vld [vmem:[%s298 + $0x3f8] sm:$0xff]
        %v492 = vld [vmem:[%s3] sm:$0x3]
        %v495 = vunpack.c.l.s4 1966171168
        %v496 = vunpack.c.0.s8 %v495
        %v497 = vlaneseq
        %v498 = vshrl.u32 %v497, 7
        %v499 = vsub.s32 %v496, %v498
        %v500 = vrot.slane %v492, %v499
        %v501 = vcombine.high %v500, %v500
        %v503 = vunpack.c.l.s4 1966171168
        %v504 = vunpack.c.0.s8 %v503
        %v505 = vlaneseq
        %v506 = vshrl.u32 %v505, 7
        %v507 = vsub.s32 %v504, %v506
        %v508 = vrot.slane %v500, %v507
        %v510 = vunpack.c.l.s4 1966171168
        %v511 = vunpack.c.0.s8 %v510
        %v512 = vlaneseq
        %v513 = vshrl.u32 %v512, 7
        %v514 = vsub.s32 %v511, %v513
        %v515 = vrot.slane %v501, %v514
        %v646 = vunpack.c.l.b16 %v364
        %v647 = vunpack.c.h.b16 %v364
        %v648 = vunpack.c.l.b16 %v365
        %v649 = vunpack.c.h.b16 %v365
        %v650 = vunpack.c.l.b16 %v366
        %v651 = vunpack.c.h.b16 %v366
        %v652 = vunpack.c.l.b16 %v367
        %v653 = vunpack.c.h.b16 %v367
        %v654 = vunpack.c.l.b16 %v368
        %v655 = vunpack.c.h.b16 %v368
        %v656 = vunpack.c.l.b16 %v369
        %v657 = vunpack.c.h.b16 %v369
        %v658 = vunpack.c.l.b16 %v370
        %v659 = vunpack.c.h.b16 %v370
        %v660 = vunpack.c.l.b16 %v371
        %v661 = vunpack.c.h.b16 %v371
        %v662 = vunpack.c.l.b16 %v372
        %v663 = vunpack.c.h.b16 %v372
        %v664 = vunpack.c.l.b16 %v373
        %v665 = vunpack.c.h.b16 %v373
        %v666 = vunpack.c.l.b16 %v374
        %v667 = vunpack.c.h.b16 %v374
        %v668 = vunpack.c.l.b16 %v375
        %v669 = vunpack.c.h.b16 %v375
        %v670 = vunpack.c.l.b16 %v376
        %v671 = vunpack.c.h.b16 %v376
        %v672 = vunpack.c.l.b16 %v377
        %v673 = vunpack.c.h.b16 %v377
        %v674 = vunpack.c.l.b16 %v378
        %v675 = vunpack.c.h.b16 %v378
        %v676 = vunpack.c.l.b16 %v379
        %v677 = vunpack.c.h.b16 %v379
        %v678 = vunpack.c.l.b16 %v380
        %v679 = vunpack.c.h.b16 %v380
        %v680 = vunpack.c.l.b16 %v381
        %v681 = vunpack.c.h.b16 %v381
        %v682 = vunpack.c.l.b16 %v382
        %v683 = vunpack.c.h.b16 %v382
        %v684 = vunpack.c.l.b16 %v383
        %v685 = vunpack.c.h.b16 %v383
        %v686 = vunpack.c.l.b16 %v384
        %v687 = vunpack.c.h.b16 %v384
        %v688 = vunpack.c.l.b16 %v385
        %v689 = vunpack.c.h.b16 %v385
        %v690 = vunpack.c.l.b16 %v386
        %v691 = vunpack.c.h.b16 %v386
        %v692 = vunpack.c.l.b16 %v387
        %v693 = vunpack.c.h.b16 %v387
        %v694 = vunpack.c.l.b16 %v388
        %v695 = vunpack.c.h.b16 %v388
        %v696 = vunpack.c.l.b16 %v389
        %v697 = vunpack.c.h.b16 %v389
        %v698 = vunpack.c.l.b16 %v390
        %v699 = vunpack.c.h.b16 %v390
        %v700 = vunpack.c.l.b16 %v391
        %v701 = vunpack.c.h.b16 %v391
        %v702 = vunpack.c.l.b16 %v392
        %v703 = vunpack.c.h.b16 %v392
        %v704 = vunpack.c.l.b16 %v393
        %v705 = vunpack.c.h.b16 %v393
        %v706 = vunpack.c.l.b16 %v394
        %v707 = vunpack.c.h.b16 %v394
        %v708 = vunpack.c.l.b16 %v395
        %v709 = vunpack.c.h.b16 %v395
        %v710 = vunpack.c.l.b16 %v396
        %v711 = vunpack.c.h.b16 %v396
        %v712 = vunpack.c.l.b16 %v397
        %v713 = vunpack.c.h.b16 %v397
        %v714 = vunpack.c.l.b16 %v398
        %v715 = vunpack.c.h.b16 %v398
        %v716 = vunpack.c.l.b16 %v399
        %v717 = vunpack.c.h.b16 %v399
        %v718 = vunpack.c.l.b16 %v400
        %v719 = vunpack.c.h.b16 %v400
        %v720 = vunpack.c.l.b16 %v401
        %v721 = vunpack.c.h.b16 %v401
        %v722 = vunpack.c.l.b16 %v402
        %v723 = vunpack.c.h.b16 %v402
        %v724 = vunpack.c.l.b16 %v403
        %v725 = vunpack.c.h.b16 %v403
        %v726 = vunpack.c.l.b16 %v404
        %v727 = vunpack.c.h.b16 %v404
        %v728 = vunpack.c.l.b16 %v405
        %v729 = vunpack.c.h.b16 %v405
        %v730 = vunpack.c.l.b16 %v406
        %v731 = vunpack.c.h.b16 %v406
        %v732 = vunpack.c.l.b16 %v407
        %v733 = vunpack.c.h.b16 %v407
        %v734 = vunpack.c.l.b16 %v408
        %v735 = vunpack.c.h.b16 %v408
        %v736 = vunpack.c.l.b16 %v409
        %v737 = vunpack.c.h.b16 %v409
        %v738 = vunpack.c.l.b16 %v410
        %v739 = vunpack.c.h.b16 %v410
        %v740 = vunpack.c.l.b16 %v411
        %v741 = vunpack.c.h.b16 %v411
        %v742 = vunpack.c.l.b16 %v412
        %v743 = vunpack.c.h.b16 %v412
        %v744 = vunpack.c.l.b16 %v413
        %v745 = vunpack.c.h.b16 %v413
        %v746 = vunpack.c.l.b16 %v414
        %v747 = vunpack.c.h.b16 %v414
        %v748 = vunpack.c.l.b16 %v415
        %v749 = vunpack.c.h.b16 %v415
        %v750 = vunpack.c.l.b16 %v416
        %v751 = vunpack.c.h.b16 %v416
        %v752 = vunpack.c.l.b16 %v417
        %v753 = vunpack.c.h.b16 %v417
        %v754 = vunpack.c.l.b16 %v418
        %v755 = vunpack.c.h.b16 %v418
        %v756 = vunpack.c.l.b16 %v419
        %v757 = vunpack.c.h.b16 %v419
        %v758 = vunpack.c.l.b16 %v420
        %v759 = vunpack.c.h.b16 %v420
        %v760 = vunpack.c.l.b16 %v421
        %v761 = vunpack.c.h.b16 %v421
        %v762 = vunpack.c.l.b16 %v422
        %v763 = vunpack.c.h.b16 %v422
        %v764 = vunpack.c.l.b16 %v423
        %v765 = vunpack.c.h.b16 %v423
        %v766 = vunpack.c.l.b16 %v424
        %v767 = vunpack.c.h.b16 %v424
        %v768 = vunpack.c.l.b16 %v425
        %v769 = vunpack.c.h.b16 %v425
        %v770 = vunpack.c.l.b16 %v426
        %v771 = vunpack.c.h.b16 %v426
        %v772 = vunpack.c.l.b16 %v427
        %v773 = vunpack.c.h.b16 %v427
        %v774 = vunpack.c.l.b16 %v428
        %v775 = vunpack.c.h.b16 %v428
        %v776 = vunpack.c.l.b16 %v429
        %v777 = vunpack.c.h.b16 %v429
        %v778 = vunpack.c.l.b16 %v430
        %v779 = vunpack.c.h.b16 %v430
        %v780 = vunpack.c.l.b16 %v431
        %v781 = vunpack.c.h.b16 %v431
        %v782 = vunpack.c.l.b16 %v432
        %v783 = vunpack.c.h.b16 %v432
        %v784 = vunpack.c.l.b16 %v433
        %v785 = vunpack.c.h.b16 %v433
        %v786 = vunpack.c.l.b16 %v434
        %v787 = vunpack.c.h.b16 %v434
        %v788 = vunpack.c.l.b16 %v435
        %v789 = vunpack.c.h.b16 %v435
        %v790 = vunpack.c.l.b16 %v436
        %v791 = vunpack.c.h.b16 %v436
        %v792 = vunpack.c.l.b16 %v437
        %v793 = vunpack.c.h.b16 %v437
        %v794 = vunpack.c.l.b16 %v438
        %v795 = vunpack.c.h.b16 %v438
        %v796 = vunpack.c.l.b16 %v439
        %v797 = vunpack.c.h.b16 %v439
        %v798 = vunpack.c.l.b16 %v440
        %v799 = vunpack.c.h.b16 %v440
        %v800 = vunpack.c.l.b16 %v441
        %v801 = vunpack.c.h.b16 %v441
        %v802 = vunpack.c.l.b16 %v442
        %v803 = vunpack.c.h.b16 %v442
        %v804 = vunpack.c.l.b16 %v443
        %v805 = vunpack.c.h.b16 %v443
        %v806 = vunpack.c.l.b16 %v444
        %v807 = vunpack.c.h.b16 %v444
        %v808 = vunpack.c.l.b16 %v445
        %v809 = vunpack.c.h.b16 %v445
        %v810 = vunpack.c.l.b16 %v446
        %v811 = vunpack.c.h.b16 %v446
        %v812 = vunpack.c.l.b16 %v447
        %v813 = vunpack.c.h.b16 %v447
        %v814 = vunpack.c.l.b16 %v448
        %v815 = vunpack.c.h.b16 %v448
        %v816 = vunpack.c.l.b16 %v449
        %v817 = vunpack.c.h.b16 %v449
        %v818 = vunpack.c.l.b16 %v450
        %v819 = vunpack.c.h.b16 %v450
        %v820 = vunpack.c.l.b16 %v451
        %v821 = vunpack.c.h.b16 %v451
        %v822 = vunpack.c.l.b16 %v452
        %v823 = vunpack.c.h.b16 %v452
        %v824 = vunpack.c.l.b16 %v453
        %v825 = vunpack.c.h.b16 %v453
        %v826 = vunpack.c.l.b16 %v454
        %v827 = vunpack.c.h.b16 %v454
        %v828 = vunpack.c.l.b16 %v455
        %v829 = vunpack.c.h.b16 %v455
        %v830 = vunpack.c.l.b16 %v456
        %v831 = vunpack.c.h.b16 %v456
        %v832 = vunpack.c.l.b16 %v457
        %v833 = vunpack.c.h.b16 %v457
        %v834 = vunpack.c.l.b16 %v458
        %v835 = vunpack.c.h.b16 %v458
        %v836 = vunpack.c.l.b16 %v459
        %v837 = vunpack.c.h.b16 %v459
        %v838 = vunpack.c.l.b16 %v460
        %v839 = vunpack.c.h.b16 %v460
        %v840 = vunpack.c.l.b16 %v461
        %v841 = vunpack.c.h.b16 %v461
        %v842 = vunpack.c.l.b16 %v462
        %v843 = vunpack.c.h.b16 %v462
        %v844 = vunpack.c.l.b16 %v463
        %v845 = vunpack.c.h.b16 %v463
        %v846 = vunpack.c.l.b16 %v464
        %v847 = vunpack.c.h.b16 %v464
        %v848 = vunpack.c.l.b16 %v465
        %v849 = vunpack.c.h.b16 %v465
        %v850 = vunpack.c.l.b16 %v466
        %v851 = vunpack.c.h.b16 %v466
        %v852 = vunpack.c.l.b16 %v467
        %v853 = vunpack.c.h.b16 %v467
        %v854 = vunpack.c.l.b16 %v468
        %v855 = vunpack.c.h.b16 %v468
        %v856 = vunpack.c.l.b16 %v469
        %v857 = vunpack.c.h.b16 %v469
        %v858 = vunpack.c.l.b16 %v470
        %v859 = vunpack.c.h.b16 %v470
        %v860 = vunpack.c.l.b16 %v471
        %v861 = vunpack.c.h.b16 %v471
        %v862 = vunpack.c.l.b16 %v472
        %v863 = vunpack.c.h.b16 %v472
        %v864 = vunpack.c.l.b16 %v473
        %v865 = vunpack.c.h.b16 %v473
        %v866 = vunpack.c.l.b16 %v474
        %v867 = vunpack.c.h.b16 %v474
        %v868 = vunpack.c.l.b16 %v475
        %v869 = vunpack.c.h.b16 %v475
        %v870 = vunpack.c.l.b16 %v476
        %v871 = vunpack.c.h.b16 %v476
        %v872 = vunpack.c.l.b16 %v477
        %v873 = vunpack.c.h.b16 %v477
        %v874 = vunpack.c.l.b16 %v478
        %v875 = vunpack.c.h.b16 %v478
        %v876 = vunpack.c.l.b16 %v479
        %v877 = vunpack.c.h.b16 %v479
        %v878 = vunpack.c.l.b16 %v480
        %v879 = vunpack.c.h.b16 %v480
        %v880 = vunpack.c.l.b16 %v481
        %v881 = vunpack.c.h.b16 %v481
        %v882 = vunpack.c.l.b16 %v482
        %v883 = vunpack.c.h.b16 %v482
        %v884 = vunpack.c.l.b16 %v483
        %v885 = vunpack.c.h.b16 %v483
        %v886 = vunpack.c.l.b16 %v484
        %v887 = vunpack.c.h.b16 %v484
        %v888 = vunpack.c.l.b16 %v485
        %v889 = vunpack.c.h.b16 %v485
        %v890 = vunpack.c.l.b16 %v486
        %v891 = vunpack.c.h.b16 %v486
        %v892 = vunpack.c.l.b16 %v487
        %v893 = vunpack.c.h.b16 %v487
        %v894 = vunpack.c.l.b16 %v488
        %v895 = vunpack.c.h.b16 %v488
        %v896 = vunpack.c.l.b16 %v489
        %v897 = vunpack.c.h.b16 %v489
        %v898 = vunpack.c.l.b16 %v490
        %v899 = vunpack.c.h.b16 %v490
        %v900 = vunpack.c.l.b16 %v491
        %v901 = vunpack.c.h.b16 %v491
        %v902 = vpack.c.b16 %v648, %v646
        %v903 = vpack.c.b16 %v649, %v647
        %v904 = vpack.c.b16 %v652, %v650
        %v905 = vpack.c.b16 %v653, %v651
        %v906 = vpack.c.b16 %v656, %v654
        %v907 = vpack.c.b16 %v657, %v655
        %v908 = vpack.c.b16 %v660, %v658
        %v909 = vpack.c.b16 %v661, %v659
        %v910 = vpack.c.b16 %v664, %v662
        %v911 = vpack.c.b16 %v665, %v663
        %v912 = vpack.c.b16 %v668, %v666
        %v913 = vpack.c.b16 %v669, %v667
        %v914 = vpack.c.b16 %v672, %v670
        %v915 = vpack.c.b16 %v673, %v671
        %v916 = vpack.c.b16 %v676, %v674
        %v917 = vpack.c.b16 %v677, %v675
        %v918 = vpack.c.b16 %v680, %v678
        %v919 = vpack.c.b16 %v681, %v679
        %v920 = vpack.c.b16 %v684, %v682
        %v921 = vpack.c.b16 %v685, %v683
        %v922 = vpack.c.b16 %v688, %v686
        %v923 = vpack.c.b16 %v689, %v687
        %v924 = vpack.c.b16 %v692, %v690
        %v925 = vpack.c.b16 %v693, %v691
        %v926 = vpack.c.b16 %v696, %v694
        %v927 = vpack.c.b16 %v697, %v695
        %v928 = vpack.c.b16 %v700, %v698
        %v929 = vpack.c.b16 %v701, %v699
        %v930 = vpack.c.b16 %v704, %v702
        %v931 = vpack.c.b16 %v705, %v703
        %v932 = vpack.c.b16 %v708, %v706
        %v933 = vpack.c.b16 %v709, %v707
        %v934 = vpack.c.b16 %v712, %v710
        %v935 = vpack.c.b16 %v713, %v711
        %v936 = vpack.c.b16 %v716, %v714
        %v937 = vpack.c.b16 %v717, %v715
        %v938 = vpack.c.b16 %v720, %v718
        %v939 = vpack.c.b16 %v721, %v719
        %v940 = vpack.c.b16 %v724, %v722
        %v941 = vpack.c.b16 %v725, %v723
        %v942 = vpack.c.b16 %v728, %v726
        %v943 = vpack.c.b16 %v729, %v727
        %v944 = vpack.c.b16 %v732, %v730
        %v945 = vpack.c.b16 %v733, %v731
        %v946 = vpack.c.b16 %v736, %v734
        %v947 = vpack.c.b16 %v737, %v735
        %v948 = vpack.c.b16 %v740, %v738
        %v949 = vpack.c.b16 %v741, %v739
        %v950 = vpack.c.b16 %v744, %v742
        %v951 = vpack.c.b16 %v745, %v743
        %v952 = vpack.c.b16 %v748, %v746
        %v953 = vpack.c.b16 %v749, %v747
        %v954 = vpack.c.b16 %v752, %v750
        %v955 = vpack.c.b16 %v753, %v751
        %v956 = vpack.c.b16 %v756, %v754
        %v957 = vpack.c.b16 %v757, %v755
        %v958 = vpack.c.b16 %v760, %v758
        %v959 = vpack.c.b16 %v761, %v759
        %v960 = vpack.c.b16 %v764, %v762
        %v961 = vpack.c.b16 %v765, %v763
        %v962 = vpack.c.b16 %v768, %v766
        %v963 = vpack.c.b16 %v769, %v767
        %v964 = vpack.c.b16 %v772, %v770
        %v965 = vpack.c.b16 %v773, %v771
        %v966 = vpack.c.b16 %v776, %v774
        %v967 = vpack.c.b16 %v777, %v775
        %v968 = vpack.c.b16 %v780, %v778
        %v969 = vpack.c.b16 %v781, %v779
        %v970 = vpack.c.b16 %v784, %v782
        %v971 = vpack.c.b16 %v785, %v783
        %v972 = vpack.c.b16 %v788, %v786
        %v973 = vpack.c.b16 %v789, %v787
        %v974 = vpack.c.b16 %v792, %v790
        %v975 = vpack.c.b16 %v793, %v791
        %v976 = vpack.c.b16 %v796, %v794
        %v977 = vpack.c.b16 %v797, %v795
        %v978 = vpack.c.b16 %v800, %v798
        %v979 = vpack.c.b16 %v801, %v799
        %v980 = vpack.c.b16 %v804, %v802
        %v981 = vpack.c.b16 %v805, %v803
        %v982 = vpack.c.b16 %v808, %v806
        %v983 = vpack.c.b16 %v809, %v807
        %v984 = vpack.c.b16 %v812, %v810
        %v985 = vpack.c.b16 %v813, %v811
        %v986 = vpack.c.b16 %v816, %v814
        %v987 = vpack.c.b16 %v817, %v815
        %v988 = vpack.c.b16 %v820, %v818
        %v989 = vpack.c.b16 %v821, %v819
        %v990 = vpack.c.b16 %v824, %v822
        %v991 = vpack.c.b16 %v825, %v823
        %v992 = vpack.c.b16 %v828, %v826
        %v993 = vpack.c.b16 %v829, %v827
        %v994 = vpack.c.b16 %v832, %v830
        %v995 = vpack.c.b16 %v833, %v831
        %v996 = vpack.c.b16 %v836, %v834
        %v997 = vpack.c.b16 %v837, %v835
        %v998 = vpack.c.b16 %v840, %v838
        %v999 = vpack.c.b16 %v841, %v839
        %v1000 = vpack.c.b16 %v844, %v842
        %v1001 = vpack.c.b16 %v845, %v843
        %v1002 = vpack.c.b16 %v848, %v846
        %v1003 = vpack.c.b16 %v849, %v847
        %v1004 = vpack.c.b16 %v852, %v850
        %v1005 = vpack.c.b16 %v853, %v851
        %v1006 = vpack.c.b16 %v856, %v854
        %v1007 = vpack.c.b16 %v857, %v855
        %v1008 = vpack.c.b16 %v860, %v858
        %v1009 = vpack.c.b16 %v861, %v859
        %v1010 = vpack.c.b16 %v864, %v862
        %v1011 = vpack.c.b16 %v865, %v863
        %v1012 = vpack.c.b16 %v868, %v866
        %v1013 = vpack.c.b16 %v869, %v867
        %v1014 = vpack.c.b16 %v872, %v870
        %v1015 = vpack.c.b16 %v873, %v871
        %v1016 = vpack.c.b16 %v876, %v874
        %v1017 = vpack.c.b16 %v877, %v875
        %v1018 = vpack.c.b16 %v880, %v878
        %v1019 = vpack.c.b16 %v881, %v879
        %v1020 = vpack.c.b16 %v884, %v882
        %v1021 = vpack.c.b16 %v885, %v883
        %v1022 = vpack.c.b16 %v888, %v886
        %v1023 = vpack.c.b16 %v889, %v887
        %v1024 = vpack.c.b16 %v892, %v890
        %v1025 = vpack.c.b16 %v893, %v891
        %v1026 = vpack.c.b16 %v896, %v894
        %v1027 = vpack.c.b16 %v897, %v895
        %v1028 = vpack.c.b16 %v900, %v898
        %v1029 = vpack.c.b16 %v901, %v899
        %1158 = vmatprep.subr.bf16.mxu0 %v903
        %1159 = vmatpush1.bf16.xpose.msra.mxu0 %v902
        %1160 = vmatprep.subr.bf16.mxu0 %v905
        %1161 = vmatpush1.bf16.xpose.msra.mxu0 %v904
        %1162 = vmatprep.subr.bf16.mxu0 %v907
        %1163 = vmatpush1.bf16.xpose.msra.mxu0 %v906
        %1164 = vmatprep.subr.bf16.mxu0 %v909
        %1165 = vmatpush1.bf16.xpose.msra.mxu0 %v908
        %1166 = vmatprep.subr.bf16.mxu0 %v911
        %1167 = vmatpush1.bf16.xpose.msra.mxu0 %v910
        %1168 = vmatprep.subr.bf16.mxu0 %v913
        %1169 = vmatpush1.bf16.xpose.msra.mxu0 %v912
        %1170 = vmatprep.subr.bf16.mxu0 %v915
        %1171 = vmatpush1.bf16.xpose.msra.mxu0 %v914
        %1172 = vmatprep.subr.bf16.mxu0 %v917
        %1173 = vmatpush1.bf16.xpose.msra.mxu0 %v916
        %1174 = vmatprep.subr.bf16.mxu0 %v919
        %1175 = vmatpush1.bf16.xpose.msra.mxu0 %v918
        %1176 = vmatprep.subr.bf16.mxu0 %v921
        %1177 = vmatpush1.bf16.xpose.msra.mxu0 %v920
        %1178 = vmatprep.subr.bf16.mxu0 %v923
        %1179 = vmatpush1.bf16.xpose.msra.mxu0 %v922
        %1180 = vmatprep.subr.bf16.mxu0 %v925
        %1181 = vmatpush1.bf16.xpose.msra.mxu0 %v924
        %1182 = vmatprep.subr.bf16.mxu0 %v927
        %1183 = vmatpush1.bf16.xpose.msra.mxu0 %v926
        %1184 = vmatprep.subr.bf16.mxu0 %v929
        %1185 = vmatpush1.bf16.xpose.msra.mxu0 %v928
        %1186 = vmatprep.subr.bf16.mxu0 %v931
        %1187 = vmatpush1.bf16.xpose.msra.mxu0 %v930
        %1188 = vmatprep.subr.bf16.mxu0 %v933
        %1189 = vmatpush1.bf16.xpose.msra.mxu0 %v932
        %1190 = vmatprep.mubr.bf16.mxu0 %v515
        %1191 = vmatmul.mubr.bf16.gmra.mrb[0].mxu0 %v508
        %v1192 = vpop.f32.mrb[0].mxu0
        %v1193 = vadd.f32 0.0, %v1192
        %v1194 = vpop.f32.mrb[0].mxu0
        %v1195 = vadd.f32 0.0, %v1194
        %v1196 = vpop.f32.mrb[0].mxu0
        %v1197 = vpop.f32.mrb[0].mxu0
        %1198 = vdwg.mxu0
        %1199 = vmatprep.subr.bf16.mxu0 %v935
        %1200 = vmatpush1.bf16.xpose.msra.mxu0 %v934
        %1201 = vmatprep.subr.bf16.mxu0 %v937
        %1202 = vmatpush1.bf16.xpose.msra.mxu0 %v936
        %1203 = vmatprep.subr.bf16.mxu0 %v939
        %1204 = vmatpush1.bf16.xpose.msra.mxu0 %v938
        %1205 = vmatprep.subr.bf16.mxu0 %v941
        %1206 = vmatpush1.bf16.xpose.msra.mxu0 %v940
        %1207 = vmatprep.subr.bf16.mxu0 %v943
        %1208 = vmatpush1.bf16.xpose.msra.mxu0 %v942
        %1209 = vmatprep.subr.bf16.mxu0 %v945
        %1210 = vmatpush1.bf16.xpose.msra.mxu0 %v944
        %1211 = vmatprep.subr.bf16.mxu0 %v947
        %1212 = vmatpush1.bf16.xpose.msra.mxu0 %v946
        %1213 = vmatprep.subr.bf16.mxu0 %v949
        %1214 = vmatpush1.bf16.xpose.msra.mxu0 %v948
        %1215 = vmatprep.subr.bf16.mxu0 %v951
        %1216 = vmatpush1.bf16.xpose.msra.mxu0 %v950
        %1217 = vmatprep.subr.bf16.mxu0 %v953
        %1218 = vmatpush1.bf16.xpose.msra.mxu0 %v952
        %1219 = vmatprep.subr.bf16.mxu0 %v955
        %1220 = vmatpush1.bf16.xpose.msra.mxu0 %v954
        %1221 = vmatprep.subr.bf16.mxu0 %v957
        %1222 = vmatpush1.bf16.xpose.msra.mxu0 %v956
        %1223 = vmatprep.subr.bf16.mxu0 %v959
        %1224 = vmatpush1.bf16.xpose.msra.mxu0 %v958
        %1225 = vmatprep.subr.bf16.mxu0 %v961
        %1226 = vmatpush1.bf16.xpose.msra.mxu0 %v960
        %1227 = vmatprep.subr.bf16.mxu0 %v963
        %1228 = vmatpush1.bf16.xpose.msra.mxu0 %v962
        %1229 = vmatprep.subr.bf16.mxu0 %v965
        %1230 = vmatpush1.bf16.xpose.msra.mxu0 %v964
        %1231 = vmatprep.mubr.bf16.mxu0 %v515
        %1232 = vmatmul.mubr.bf16.gmra.mrb[0].mxu0 %v508
        %v1233 = vpop.f32.mrb[0].mxu0
        %v1234 = vadd.f32 0.0, %v1233
        %v1235 = vpop.f32.mrb[0].mxu0
        %v1236 = vadd.f32 0.0, %v1235
        %v1237 = vpop.f32.mrb[0].mxu0
        %v1238 = vpop.f32.mrb[0].mxu0
        %1239 = vdwg.mxu0
        %1240 = vmatprep.subr.bf16.mxu0 %v967
        %1241 = vmatpush1.bf16.xpose.msra.mxu0 %v966
        %1242 = vmatprep.subr.bf16.mxu0 %v969
        %1243 = vmatpush1.bf16.xpose.msra.mxu0 %v968
        %1244 = vmatprep.subr.bf16.mxu0 %v971
        %1245 = vmatpush1.bf16.xpose.msra.mxu0 %v970
        %1246 = vmatprep.subr.bf16.mxu0 %v973
        %1247 = vmatpush1.bf16.xpose.msra.mxu0 %v972
        %1248 = vmatprep.subr.bf16.mxu0 %v975
        %1249 = vmatpush1.bf16.xpose.msra.mxu0 %v974
        %1250 = vmatprep.subr.bf16.mxu0 %v977
        %1251 = vmatpush1.bf16.xpose.msra.mxu0 %v976
        %1252 = vmatprep.subr.bf16.mxu0 %v979
        %1253 = vmatpush1.bf16.xpose.msra.mxu0 %v978
        %1254 = vmatprep.subr.bf16.mxu0 %v981
        %1255 = vmatpush1.bf16.xpose.msra.mxu0 %v980
        %1256 = vmatprep.subr.bf16.mxu0 %v983
        %1257 = vmatpush1.bf16.xpose.msra.mxu0 %v982
        %1258 = vmatprep.subr.bf16.mxu0 %v985
        %1259 = vmatpush1.bf16.xpose.msra.mxu0 %v984
        %1260 = vmatprep.subr.bf16.mxu0 %v987
        %1261 = vmatpush1.bf16.xpose.msra.mxu0 %v986
        %1262 = vmatprep.subr.bf16.mxu0 %v989
        %1263 = vmatpush1.bf16.xpose.msra.mxu0 %v988
        %1264 = vmatprep.subr.bf16.mxu0 %v991
        %1265 = vmatpush1.bf16.xpose.msra.mxu0 %v990
        %1266 = vmatprep.subr.bf16.mxu0 %v993
        %1267 = vmatpush1.bf16.xpose.msra.mxu0 %v992
        %1268 = vmatprep.subr.bf16.mxu0 %v995
        %1269 = vmatpush1.bf16.xpose.msra.mxu0 %v994
        %1270 = vmatprep.subr.bf16.mxu0 %v997
        %1271 = vmatpush1.bf16.xpose.msra.mxu0 %v996
        %1272 = vmatprep.mubr.bf16.mxu0 %v515
        %1273 = vmatmul.mubr.bf16.gmra.mrb[0].mxu0 %v508
        %v1274 = vpop.f32.mrb[0].mxu0
        %v1275 = vadd.f32 0.0, %v1274
        %v1276 = vpop.f32.mrb[0].mxu0
        %v1277 = vadd.f32 0.0, %v1276
        %v1278 = vpop.f32.mrb[0].mxu0
        %v1279 = vpop.f32.mrb[0].mxu0
        %1280 = vdwg.mxu0
        %1281 = vmatprep.subr.bf16.mxu0 %v999
        %1282 = vmatpush1.bf16.xpose.msra.mxu0 %v998
        %1283 = vmatprep.subr.bf16.mxu0 %v1001
        %1284 = vmatpush1.bf16.xpose.msra.mxu0 %v1000
        %1285 = vmatprep.subr.bf16.mxu0 %v1003
        %1286 = vmatpush1.bf16.xpose.msra.mxu0 %v1002
        %1287 = vmatprep.subr.bf16.mxu0 %v1005
        %1288 = vmatpush1.bf16.xpose.msra.mxu0 %v1004
        %1289 = vmatprep.subr.bf16.mxu0 %v1007
        %1290 = vmatpush1.bf16.xpose.msra.mxu0 %v1006
        %1291 = vmatprep.subr.bf16.mxu0 %v1009
        %1292 = vmatpush1.bf16.xpose.msra.mxu0 %v1008
        %1293 = vmatprep.subr.bf16.mxu0 %v1011
        %1294 = vmatpush1.bf16.xpose.msra.mxu0 %v1010
        %1295 = vmatprep.subr.bf16.mxu0 %v1013
        %1296 = vmatpush1.bf16.xpose.msra.mxu0 %v1012
        %1297 = vmatprep.subr.bf16.mxu0 %v1015
        %1298 = vmatpush1.bf16.xpose.msra.mxu0 %v1014
        %1299 = vmatprep.subr.bf16.mxu0 %v1017
        %1300 = vmatpush1.bf16.xpose.msra.mxu0 %v1016
        %1301 = vmatprep.subr.bf16.mxu0 %v1019
        %1302 = vmatpush1.bf16.xpose.msra.mxu0 %v1018
        %1303 = vmatprep.subr.bf16.mxu0 %v1021
        %1304 = vmatpush1.bf16.xpose.msra.mxu0 %v1020
        %1305 = vmatprep.subr.bf16.mxu0 %v1023
        %1306 = vmatpush1.bf16.xpose.msra.mxu0 %v1022
        %1307 = vmatprep.subr.bf16.mxu0 %v1025
        %1308 = vmatpush1.bf16.xpose.msra.mxu0 %v1024
        %1309 = vmatprep.subr.bf16.mxu0 %v1027
        %1310 = vmatpush1.bf16.xpose.msra.mxu0 %v1026
        %1311 = vmatprep.subr.bf16.mxu0 %v1029
        %1312 = vmatpush1.bf16.xpose.msra.mxu0 %v1028
        %1313 = vmatprep.mubr.bf16.mxu0 %v515
        %1314 = vmatmul.mubr.bf16.gmra.mrb[0].mxu0 %v508
        %v1315 = vpop.f32.mrb[0].mxu0
        %v1316 = vadd.f32 0.0, %v1315
        %v1317 = vpop.f32.mrb[0].mxu0
        %v1318 = vadd.f32 0.0, %v1317
        %v1319 = vpop.f32.mrb[0].mxu0
        %v1320 = vpop.f32.mrb[0].mxu0
        %1321 = vdwg.mxu0
        %s1322 = sld [smem:[#allocation9]]
        %s1323 = sld [smem:[#allocation9 + $0x1]]
        %v1324 = vlaneseq
        %v1325 = vand.u32 %v1324, 127
        %v1326 = vlaneseq
        %v1327 = vshrl.u32 %v1326, 7
        %vm1328 = vcmask 1041408
        %v1329 = vsel %vm1328, %v1193, -inf
        %1330 = vmax.xlane.f32.xlu0 %v1329
        %v1331 = vpop.xlane.xlu0 %1330
        %v1332 = vsub.f32 %v1193, %v1331
        %v1333 = vmul.f32 %v1332, 1.442695
        %v1334 = vpow.pop %v1333
        %v1335 = vsel %vm1328, %v1334, 0.0
        %1336 = vadd.xlane.f32.xlu0 %v1335
        %v1337 = vpop.xlane.xlu0 %1336
        %v1338 = vlog2.pop %v1337
        %v1339 = vmul.f32 %v1338, 0.6931472
        %v1340 = vadd.f32 %v1339, %v1331
        %s1341 = smul.u32 %s39, 8
        %s1342 = sld [smem:[#allocation3 + %s1341]]
        %s1343 = sld [smem:[#allocation4 + %s1341]]
        %vm1344 = vcmp.eq.s32.totalorder %v1327, 0
        %v1345 = vstv %s1342
        %v1346 = vstv %s1343
        %v1347 = vsel %vm1344, %v1345, %v1346
        %vm1348 = vcmp.eq.s32.totalorder %v1325, %v1347
        %v1349 = vsel %vm1348, %v1193, 0.0
        %v1350 = vsel %vm1328, %v1349, 0.0
        %1351 = vadd.xlane.f32.xlu0 %v1350
        %v1352 = vpop.xlane.xlu0 %1351
        %v1353 = vsub.f32 %v1340, %v1352
        %vm1354 = vcmp.eq.f32.partialorder %v1193, %v1331
        %v1355 = vsel %vm1354, %v1325, 128
        %v1356 = vsel %vm1328, %v1355, 2147483647
        %v1357 = vand.u32 %v1356, 65535
        %v1358 = vshra.s32 %v1356, 16
        %v1359 = vcvt.s32.f32 %v1357
        %v1360 = vcvt.s32.f32 %v1358
        %1361 = vmin.xlane.f32.xlu0 %v1360
        %v1362 = vpop.xlane.xlu0 %1361
        %vm1363 = vcmp.eq.f32.partialorder %v1360, %v1362
        %v1364 = vsel %vm1363, %v1359, inf
        %1365 = vmin.xlane.f32.xlu0 %v1364
        %v1366 = vpop.xlane.xlu0 %1365
        %v1367 = vcvt.f32.s32 %v1366
        %v1368 = vcvt.f32.s32 %v1362
        %v1369 = vshll.u32 %v1368, 16
        %v1370 = vadd.s32 %v1369, %v1367
        %v1371 = vstv %s1322
        %v1372 = vadd.f32 %v1193, %v1371
        %v1373 = vstv %s1323
        %v1374 = vadd.f32 %v1193, %v1373
        %v1376 = vrot.slane %v1353, 1
        %v1378 = vadd.f32 %v1353, %v1376
        %v1379 = vsel %vm1328, %v1195, -inf
        %1380 = vmax.xlane.f32.xlu0 %v1379
        %v1381 = vpop.xlane.xlu0 %1380
        %v1382 = vsub.f32 %v1195, %v1381
        %v1383 = vmul.f32 %v1382, 1.442695
        %v1384 = vpow.pop %v1383
        %v1385 = vsel %vm1328, %v1384, 0.0
        %1386 = vadd.xlane.f32.xlu0 %v1385
        %v1387 = vpop.xlane.xlu0 %1386
        %v1388 = vlog2.pop %v1387
        %v1389 = vmul.f32 %v1388, 0.6931472
        %v1390 = vadd.f32 %v1389, %v1381
        %s1391 = sadd.s32 %s1341, 1
        %s1392 = sld [smem:[#allocation3 + %s1391]]
        %s1393 = sld [smem:[#allocation4 + %s1391]]
        %v1394 = vstv %s1392
        %v1395 = vstv %s1393
        %v1396 = vsel %vm1344, %v1394, %v1395
        %vm1397 = vcmp.eq.s32.totalorder %v1325, %v1396
        %v1398 = vsel %vm1397, %v1195, 0.0
        %v1399 = vsel %vm1328, %v1398, 0.0
        %1400 = vadd.xlane.f32.xlu0 %v1399
        %v1401 = vpop.xlane.xlu0 %1400
        %v1402 = vsub.f32 %v1390, %v1401
        %vm1403 = vcmp.eq.f32.partialorder %v1195, %v1381
        %v1404 = vsel %vm1403, %v1325, 128
        %v1405 = vsel %vm1328, %v1404, 2147483647
        %v1406 = vand.u32 %v1405, 65535
        %v1407 = vshra.s32 %v1405, 16
        %v1408 = vcvt.s32.f32 %v1406
        %v1409 = vcvt.s32.f32 %v1407
        %1410 = vmin.xlane.f32.xlu0 %v1409
        %v1411 = vpop.xlane.xlu0 %1410
        %vm1412 = vcmp.eq.f32.partialorder %v1409, %v1411
        %v1413 = vsel %vm1412, %v1408, inf
        %1414 = vmin.xlane.f32.xlu0 %v1413
        %v1415 = vpop.xlane.xlu0 %1414
        %v1416 = vcvt.f32.s32 %v1415
        %v1417 = vcvt.f32.s32 %v1411
        %v1418 = vshll.u32 %v1417, 16
        %v1419 = vadd.s32 %v1418, %v1416
        %v1420 = vadd.f32 %v1195, %v1371
        %v1421 = vadd.f32 %v1195, %v1373
        %v1423 = vrot.slane %v1402, 1
        %v1425 = vadd.f32 %v1402, %v1423
        %v1426 = vsel %vm1328, %v1234, -inf
        %1427 = vmax.xlane.f32.xlu0 %v1426
        %v1428 = vpop.xlane.xlu0 %1427
        %v1429 = vsub.f32 %v1234, %v1428
        %v1430 = vmul.f32 %v1429, 1.442695
        %v1431 = vpow.pop %v1430
        %v1432 = vsel %vm1328, %v1431, 0.0
        %1433 = vadd.xlane.f32.xlu0 %v1432
        %v1434 = vpop.xlane.xlu0 %1433
        %v1435 = vlog2.pop %v1434
        %v1436 = vmul.f32 %v1435, 0.6931472
        %v1437 = vadd.f32 %v1436, %v1428
        %s1438 = sadd.s32 %s1341, 2
        %s1439 = sld [smem:[#allocation3 + %s1438]]
        %s1440 = sld [smem:[#allocation4 + %s1438]]
        %v1441 = vstv %s1439
        %v1442 = vstv %s1440
        %v1443 = vsel %vm1344, %v1441, %v1442
        %vm1444 = vcmp.eq.s32.totalorder %v1325, %v1443
        %v1445 = vsel %vm1444, %v1234, 0.0
        %v1446 = vsel %vm1328, %v1445, 0.0
        %1447 = vadd.xlane.f32.xlu0 %v1446
        %v1448 = vpop.xlane.xlu0 %1447
        %v1449 = vsub.f32 %v1437, %v1448
        %vm1450 = vcmp.eq.f32.partialorder %v1234, %v1428
        %v1451 = vsel %vm1450, %v1325, 128
        %v1452 = vsel %vm1328, %v1451, 2147483647
        %v1453 = vand.u32 %v1452, 65535
        %v1454 = vshra.s32 %v1452, 16
        %v1455 = vcvt.s32.f32 %v1453
        %v1456 = vcvt.s32.f32 %v1454
        %1457 = vmin.xlane.f32.xlu0 %v1456
        %v1458 = vpop.xlane.xlu0 %1457
        %vm1459 = vcmp.eq.f32.partialorder %v1456, %v1458
        %v1460 = vsel %vm1459, %v1455, inf
        %1461 = vmin.xlane.f32.xlu0 %v1460
        %v1462 = vpop.xlane.xlu0 %1461
        %v1463 = vcvt.f32.s32 %v1462
        %v1464 = vcvt.f32.s32 %v1458
        %v1465 = vshll.u32 %v1464, 16
        %v1466 = vadd.s32 %v1465, %v1463
        %v1467 = vadd.f32 %v1234, %v1371
        %v1468 = vadd.f32 %v1234, %v1373
        %v1470 = vrot.slane %v1449, 1
        %v1472 = vadd.f32 %v1449, %v1470
        %v1473 = vsel %vm1328, %v1236, -inf
        %1474 = vmax.xlane.f32.xlu0 %v1473
        %v1475 = vpop.xlane.xlu0 %1474
        %v1476 = vsub.f32 %v1236, %v1475
        %v1477 = vmul.f32 %v1476, 1.442695
        %v1478 = vpow.pop %v1477
        %v1479 = vsel %vm1328, %v1478, 0.0
        %1480 = vadd.xlane.f32.xlu0 %v1479
        %v1481 = vpop.xlane.xlu0 %1480
        %v1482 = vlog2.pop %v1481
        %v1483 = vmul.f32 %v1482, 0.6931472
        %v1484 = vadd.f32 %v1483, %v1475
        %s1485 = sadd.s32 %s1341, 3
        %s1486 = sld [smem:[#allocation3 + %s1485]]
        %s1487 = sld [smem:[#allocation4 + %s1485]]
        %v1488 = vstv %s1486
        %v1489 = vstv %s1487
        %v1490 = vsel %vm1344, %v1488, %v1489
        %vm1491 = vcmp.eq.s32.totalorder %v1325, %v1490
        %v1492 = vsel %vm1491, %v1236, 0.0
        %v1493 = vsel %vm1328, %v1492, 0.0
        %1494 = vadd.xlane.f32.xlu0 %v1493
        %v1495 = vpop.xlane.xlu0 %1494
        %v1496 = vsub.f32 %v1484, %v1495
        %vm1497 = vcmp.eq.f32.partialorder %v1236, %v1475
        %v1498 = vsel %vm1497, %v1325, 128
        %v1499 = vsel %vm1328, %v1498, 2147483647
        %v1500 = vand.u32 %v1499, 65535
        %v1501 = vshra.s32 %v1499, 16
        %v1502 = vcvt.s32.f32 %v1500
        %v1503 = vcvt.s32.f32 %v1501
        %1504 = vmin.xlane.f32.xlu0 %v1503
        %v1505 = vpop.xlane.xlu0 %1504
        %vm1506 = vcmp.eq.f32.partialorder %v1503, %v1505
        %v1507 = vsel %vm1506, %v1502, inf
        %1508 = vmin.xlane.f32.xlu0 %v1507
        %v1509 = vpop.xlane.xlu0 %1508
        %v1510 = vcvt.f32.s32 %v1509
        %v1511 = vcvt.f32.s32 %v1505
        %v1512 = vshll.u32 %v1511, 16
        %v1513 = vadd.s32 %v1512, %v1510
        %v1514 = vadd.f32 %v1236, %v1371
        %v1515 = vadd.f32 %v1236, %v1373
        %v1517 = vrot.slane %v1496, 1
        %v1519 = vadd.f32 %v1496, %v1517
        %v1520 = vsel %vm1328, %v1275, -inf
        %1521 = vmax.xlane.f32.xlu0 %v1520
        %v1522 = vpop.xlane.xlu0 %1521
        %v1523 = vsub.f32 %v1275, %v1522
        %v1524 = vmul.f32 %v1523, 1.442695
        %v1525 = vpow.pop %v1524
        %v1526 = vsel %vm1328, %v1525, 0.0
        %1527 = vadd.xlane.f32.xlu0 %v1526
        %v1528 = vpop.xlane.xlu0 %1527
        %v1529 = vlog2.pop %v1528
        %v1530 = vmul.f32 %v1529, 0.6931472
        %v1531 = vadd.f32 %v1530, %v1522
        %s1532 = sadd.s32 %s1341, 4
        %s1533 = sld [smem:[#allocation3 + %s1532]]
        %s1534 = sld [smem:[#allocation4 + %s1532]]
        %v1535 = vstv %s1533
        %v1536 = vstv %s1534
        %v1537 = vsel %vm1344, %v1535, %v1536
        %vm1538 = vcmp.eq.s32.totalorder %v1325, %v1537
        %v1539 = vsel %vm1538, %v1275, 0.0
        %v1540 = vsel %vm1328, %v1539, 0.0
        %1541 = vadd.xlane.f32.xlu0 %v1540
        %v1542 = vpop.xlane.xlu0 %1541
        %v1543 = vsub.f32 %v1531, %v1542
        %vm1544 = vcmp.eq.f32.partialorder %v1275, %v1522
        %v1545 = vsel %vm1544, %v1325, 128
        %v1546 = vsel %vm1328, %v1545, 2147483647
        %v1547 = vand.u32 %v1546, 65535
        %v1548 = vshra.s32 %v1546, 16
        %v1549 = vcvt.s32.f32 %v1547
        %v1550 = vcvt.s32.f32 %v1548
        %1551 = vmin.xlane.f32.xlu0 %v1550
        %v1552 = vpop.xlane.xlu0 %1551
        %vm1553 = vcmp.eq.f32.partialorder %v1550, %v1552
        %v1554 = vsel %vm1553, %v1549, inf
        %1555 = vmin.xlane.f32.xlu0 %v1554
        %v1556 = vpop.xlane.xlu0 %1555
        %v1557 = vcvt.f32.s32 %v1556
        %v1558 = vcvt.f32.s32 %v1552
        %v1559 = vshll.u32 %v1558, 16
        %v1560 = vadd.s32 %v1559, %v1557
        %v1561 = vadd.f32 %v1275, %v1371
        %v1562 = vadd.f32 %v1275, %v1373
        %v1564 = vrot.slane %v1543, 1
        %v1566 = vadd.f32 %v1543, %v1564
        %v1567 = vsel %vm1328, %v1277, -inf
        %1568 = vmax.xlane.f32.xlu0 %v1567
        %v1569 = vpop.xlane.xlu0 %1568
        %v1570 = vsub.f32 %v1277, %v1569
        %v1571 = vmul.f32 %v1570, 1.442695
        %v1572 = vpow.pop %v1571
        %v1573 = vsel %vm1328, %v1572, 0.0
        %1574 = vadd.xlane.f32.xlu0 %v1573
        %v1575 = vpop.xlane.xlu0 %1574
        %v1576 = vlog2.pop %v1575
        %v1577 = vmul.f32 %v1576, 0.6931472
        %v1578 = vadd.f32 %v1577, %v1569
        %s1579 = sadd.s32 %s1341, 5
        %s1580 = sld [smem:[#allocation3 + %s1579]]
        %s1581 = sld [smem:[#allocation4 + %s1579]]
        %v1582 = vstv %s1580
        %v1583 = vstv %s1581
        %v1584 = vsel %vm1344, %v1582, %v1583
        %vm1585 = vcmp.eq.s32.totalorder %v1325, %v1584
        %v1586 = vsel %vm1585, %v1277, 0.0
        %v1587 = vsel %vm1328, %v1586, 0.0
        %1588 = vadd.xlane.f32.xlu0 %v1587
        %v1589 = vpop.xlane.xlu0 %1588
        %v1590 = vsub.f32 %v1578, %v1589
        %vm1591 = vcmp.eq.f32.partialorder %v1277, %v1569
        %v1592 = vsel %vm1591, %v1325, 128
        %v1593 = vsel %vm1328, %v1592, 2147483647
        %v1594 = vand.u32 %v1593, 65535
        %v1595 = vshra.s32 %v1593, 16
        %v1596 = vcvt.s32.f32 %v1594
        %v1597 = vcvt.s32.f32 %v1595
        %1598 = vmin.xlane.f32.xlu0 %v1597
        %v1599 = vpop.xlane.xlu0 %1598
        %vm1600 = vcmp.eq.f32.partialorder %v1597, %v1599
        %v1601 = vsel %vm1600, %v1596, inf
        %1602 = vmin.xlane.f32.xlu0 %v1601
        %v1603 = vpop.xlane.xlu0 %1602
        %v1604 = vcvt.f32.s32 %v1603
        %v1605 = vcvt.f32.s32 %v1599
        %v1606 = vshll.u32 %v1605, 16
        %v1607 = vadd.s32 %v1606, %v1604
        %v1608 = vadd.f32 %v1277, %v1371
        %v1609 = vadd.f32 %v1277, %v1373
        %v1611 = vrot.slane %v1590, 1
        %v1613 = vadd.f32 %v1590, %v1611
        %v1614 = vsel %vm1328, %v1316, -inf
        %1615 = vmax.xlane.f32.xlu0 %v1614
        %v1616 = vpop.xlane.xlu0 %1615
        %v1617 = vsub.f32 %v1316, %v1616
        %v1618 = vmul.f32 %v1617, 1.442695
        %v1619 = vpow.pop %v1618
        %v1620 = vsel %vm1328, %v1619, 0.0
        %1621 = vadd.xlane.f32.xlu0 %v1620
        %v1622 = vpop.xlane.xlu0 %1621
        %v1623 = vlog2.pop %v1622
        %v1624 = vmul.f32 %v1623, 0.6931472
        %v1625 = vadd.f32 %v1624, %v1616
        %s1626 = sadd.s32 %s1341, 6
        %s1627 = sld [smem:[#allocation3 + %s1626]]
        %s1628 = sld [smem:[#allocation4 + %s1626]]
        %v1629 = vstv %s1627
        %v1630 = vstv %s1628
        %v1631 = vsel %vm1344, %v1629, %v1630
        %vm1632 = vcmp.eq.s32.totalorder %v1325, %v1631
        %v1633 = vsel %vm1632, %v1316, 0.0
        %v1634 = vsel %vm1328, %v1633, 0.0
        %1635 = vadd.xlane.f32.xlu0 %v1634
        %v1636 = vpop.xlane.xlu0 %1635
        %v1637 = vsub.f32 %v1625, %v1636
        %vm1638 = vcmp.eq.f32.partialorder %v1316, %v1616
        %v1639 = vsel %vm1638, %v1325, 128
        %v1640 = vsel %vm1328, %v1639, 2147483647
        %v1641 = vand.u32 %v1640, 65535
        %v1642 = vshra.s32 %v1640, 16
        %v1643 = vcvt.s32.f32 %v1641
        %v1644 = vcvt.s32.f32 %v1642
        %1645 = vmin.xlane.f32.xlu0 %v1644
        %v1646 = vpop.xlane.xlu0 %1645
        %vm1647 = vcmp.eq.f32.partialorder %v1644, %v1646
        %v1648 = vsel %vm1647, %v1643, inf
        %1649 = vmin.xlane.f32.xlu0 %v1648
        %v1650 = vpop.xlane.xlu0 %1649
        %v1651 = vcvt.f32.s32 %v1650
        %v1652 = vcvt.f32.s32 %v1646
        %v1653 = vshll.u32 %v1652, 16
        %v1654 = vadd.s32 %v1653, %v1651
        %v1655 = vadd.f32 %v1316, %v1371
        %v1656 = vadd.f32 %v1316, %v1373
        %v1658 = vrot.slane %v1637, 1
        %v1660 = vadd.f32 %v1637, %v1658
        %v1661 = vsel %vm1328, %v1318, -inf
        %1662 = vmax.xlane.f32.xlu0 %v1661
        %v1663 = vpop.xlane.xlu0 %1662
        %v1664 = vsub.f32 %v1318, %v1663
        %v1665 = vmul.f32 %v1664, 1.442695
        %v1666 = vpow.pop %v1665
        %v1667 = vsel %vm1328, %v1666, 0.0
        %1668 = vadd.xlane.f32.xlu0 %v1667
        %v1669 = vpop.xlane.xlu0 %1668
        %v1670 = vlog2.pop %v1669
        %v1671 = vmul.f32 %v1670, 0.6931472
        %v1672 = vadd.f32 %v1671, %v1663
        %s1673 = sadd.s32 %s1341, 7
        %s1674 = sld [smem:[#allocation3 + %s1673]]
        %s1675 = sld [smem:[#allocation4 + %s1673]]
        %v1676 = vstv %s1674
        %v1677 = vstv %s1675
        %v1678 = vsel %vm1344, %v1676, %v1677
        %vm1679 = vcmp.eq.s32.totalorder %v1325, %v1678
        %v1680 = vsel %vm1679, %v1318, 0.0
        %v1681 = vsel %vm1328, %v1680, 0.0
        %1682 = vadd.xlane.f32.xlu0 %v1681
        %v1683 = vpop.xlane.xlu0 %1682
        %v1684 = vsub.f32 %v1672, %v1683
        %vm1685 = vcmp.eq.f32.partialorder %v1318, %v1663
        %v1686 = vsel %vm1685, %v1325, 128
        %v1687 = vsel %vm1328, %v1686, 2147483647
        %v1688 = vand.u32 %v1687, 65535
        %v1689 = vshra.s32 %v1687, 16
        %v1690 = vcvt.s32.f32 %v1688
        %v1691 = vcvt.s32.f32 %v1689
        %1692 = vmin.xlane.f32.xlu0 %v1691
        %v1693 = vpop.xlane.xlu0 %1692
        %vm1694 = vcmp.eq.f32.partialorder %v1691, %v1693
        %v1695 = vsel %vm1694, %v1690, inf
        %1696 = vmin.xlane.f32.xlu0 %v1695
        %v1697 = vpop.xlane.xlu0 %1696
        %v1698 = vcvt.f32.s32 %v1697
        %v1699 = vcvt.f32.s32 %v1693
        %v1700 = vshll.u32 %v1699, 16
        %v1701 = vadd.s32 %v1700, %v1698
        %v1702 = vadd.f32 %v1318, %v1371
        %v1703 = vadd.f32 %v1318, %v1373
        %v1705 = vrot.slane %v1684, 1
        %v1707 = vadd.f32 %v1684, %v1705
        %v1709 = vrot.slane %v1420, 7
        %v1712 = vrot.slane %v1467, 6
        %v1715 = vrot.slane %v1514, 5
        %v1718 = vrot.slane %v1561, 4
        %v1721 = vrot.slane %v1608, 3
        %v1724 = vrot.slane %v1655, 2
        %v1727 = vrot.slane %v1702, 1
        %vm1729 = vcmask 1040384
        %v1730 = vsel %vm1729, %v1372, %v1709
        %v1731 = vsel %vm1328, %v1730, %v1712
        %vm1732 = vcmask 1042432
        %v1733 = vsel %vm1732, %v1731, %v1715
        %vm1734 = vcmask 1043456
        %v1735 = vsel %vm1734, %v1733, %v1718
        %vm1736 = vcmask 1044480
        %v1737 = vsel %vm1736, %v1735, %v1721
        %vm1738 = vcmask 1045504
        %v1739 = vsel %vm1738, %v1737, %v1724
        %vm1740 = vcmask 1046528
        %v1741 = vsel %vm1740, %v1739, %v1727
        %1742 = vst [vmem:[%s325] sm:$0xff] %v1741
        %v1744 = vrot.slane %v1374, 1
        %v1747 = vrot.slane %v1468, 7
        %v1750 = vrot.slane %v1515, 6
        %v1753 = vrot.slane %v1562, 5
        %v1756 = vrot.slane %v1609, 4
        %v1759 = vrot.slane %v1656, 3
        %v1762 = vrot.slane %v1703, 2
        %v1764 = vsel %vm1729, %v1744, %v1421
        %v1765 = vsel %vm1328, %v1764, %v1747
        %v1766 = vsel %vm1732, %v1765, %v1750
        %v1767 = vsel %vm1734, %v1766, %v1753
        %v1768 = vsel %vm1736, %v1767, %v1756
        %v1769 = vsel %vm1738, %v1768, %v1759
        %v1770 = vsel %vm1740, %v1769, %v1762
        %1771 = vst [vmem:[%s332] sm:$0xff] %v1770
        %v1773 = vrot.slane %v1425, 7
        %v1776 = vrot.slane %v1472, 6
        %v1779 = vrot.slane %v1519, 5
        %v1782 = vrot.slane %v1566, 4
        %v1785 = vrot.slane %v1613, 3
        %v1788 = vrot.slane %v1660, 2
        %v1791 = vrot.slane %v1707, 1
        %v1793 = vsel %vm1729, %v1378, %v1773
        %v1794 = vsel %vm1328, %v1793, %v1776
        %v1795 = vsel %vm1732, %v1794, %v1779
        %v1796 = vsel %vm1734, %v1795, %v1782
        %v1797 = vsel %vm1736, %v1796, %v1785
        %v1798 = vsel %vm1738, %v1797, %v1788
        %v1799 = vsel %vm1740, %v1798, %v1791
        %vm1800 = vcmask 7168
        %1801 = vst.msk [vmem:[%s355] sm:$0xff] %vm1800, %v1799
        %v1802 = vrot.slane %v1419, 7
        %v1803 = vrot.slane %v1466, 6
        %v1804 = vrot.slane %v1513, 5
        %v1805 = vrot.slane %v1560, 4
        %v1806 = vrot.slane %v1607, 3
        %v1807 = vrot.slane %v1654, 2
        %v1808 = vrot.slane %v1701, 1
        %v1809 = vsel %vm1729, %v1370, %v1802
        %v1810 = vsel %vm1328, %v1809, %v1803
        %v1811 = vsel %vm1732, %v1810, %v1804
        %v1812 = vsel %vm1734, %v1811, %v1805
        %v1813 = vsel %vm1736, %v1812, %v1806
        %v1814 = vsel %vm1738, %v1813, %v1807
        %v1815 = vsel %vm1740, %v1814, %v1808
        %1816 = vst.msk [vmem:[%s359] sm:$0xff] %vm1800, %v1815
        %v1817 = vrot.slane %v1370, 1
        %v1818 = vrot.slane %v1466, 7
        %v1819 = vrot.slane %v1513, 6
        %v1820 = vrot.slane %v1560, 5
        %v1821 = vrot.slane %v1607, 4
        %v1822 = vrot.slane %v1654, 3
        %v1823 = vrot.slane %v1701, 2
        %v1824 = vsel %vm1729, %v1817, %v1419
        %v1825 = vsel %vm1328, %v1824, %v1818
        %v1826 = vsel %vm1732, %v1825, %v1819
        %v1827 = vsel %vm1734, %v1826, %v1820
        %v1828 = vsel %vm1736, %v1827, %v1821
        %v1829 = vsel %vm1738, %v1828, %v1822
        %v1830 = vsel %vm1740, %v1829, %v1823
        %1831 = vst.msk [vmem:[%s363] sm:$0xff] %vm1800, %v1830
        %s1832 = sand.u32 %s115, 1
        %s1833 = scalar_lea.sflag [#allocation7], %s1832
        %s1834 = sand.u32 %s115, 1
        %s1835 = smul.addr %s1834, 8
        %s1836 = scalar_lea.vmem [#allocation10], %s1835
        %s1837 = sand.u32 %s141, 1
        %s1838 = scalar_lea.sflag [#allocation12], %s1837
        %s1839 = sand.u32 %s141, 1
        %s1840 = smul.addr %s1839, 8
        %s1841 = scalar_lea.vmem [#allocation11], %s1840
        %p1842 = scmp.lt.s32.totalorder %s39, 1
        %s1843 = scalar_select %p1842, %s39, 1
        %s1844 = smul.addr %s1843, 8
        %s1845 = scalar_lea.vmem %s7, %s1844
        %p1846 = scmp.lt.s32.totalorder %s39, 1
        %s1847 = scalar_select %p1846, %s39, 1
        %s1848 = smul.addr %s1847, 8
        %s1849 = scalar_lea.vmem %s8, %s1848
        %p1850 = scmp.lt.s32.totalorder %s39, 1
        %s1851 = scalar_select %p1850, %s39, 1
        %s1852 = smul.addr %s1851, 8
        %s1853 = scalar_lea.vmem %s9, %s1852
        // Predicated region
        $region41: #{tpu_custom_call.1} parent=31 // pred_check
          %p1854 = pneg %p125
        $region42: #{tpu_custom_call.1} parent=31 // pred_check_branch
          %1856 = sbr.rel (%p1854) target = $region44
        $region43: #{tpu_custom_call.1} parent=31 // pred_region
          %s1858 = ssub.s32 128, 128
          %1859 = vsyncadd %s1833, %s1858
          %s1860 = smul.addr %s39, 128
          %s1861 = scalar_lea.hbm %s5, %s1860
          %s1863 = sshll.u32 %s1836, 4
          %s1864 = int_to_ptr.vmem [resolvable:$true] %s1863
          %1866 = dma.vmem_to_hbm [thread:$0]  %s1864, 128, %s1861, %s1833
        $region44: #{tpu_custom_call.1} parent=31 // pred_fallthru
          _
        // Predicated region
        $region45: #{tpu_custom_call.1} parent=31 // pred_check
          %p1867 = pneg %p151
        $region46: #{tpu_custom_call.1} parent=31 // pred_check_branch
          %1869 = sbr.rel (%p1867) target = $region48
        $region47: #{tpu_custom_call.1} parent=31 // pred_region
          %s1871 = ssub.s32 128, 128
          %1872 = vsyncadd %s1838, %s1871
          %s1873 = smul.addr %s39, 128
          %s1874 = scalar_lea.hbm %s6, %s1873
          %s1876 = sshll.u32 %s1841, 4
          %s1877 = int_to_ptr.vmem [resolvable:$true] %s1876
          %1879 = dma.vmem_to_hbm [thread:$0]  %s1877, 128, %s1874, %s1838
        $region48: #{tpu_custom_call.1} parent=31 // pred_fallthru
          _
        // Predicated region
        $region49: #{tpu_custom_call.1} parent=31 // pred_check
          %p1880 = pneg %p177
        $region50: #{tpu_custom_call.1} parent=31 // pred_check_branch
          %1882 = sbr.rel (%p1880) target = $region52
        $region51: #{tpu_custom_call.1} parent=31 // pred_region
          _
        $region52: #{tpu_custom_call.1} parent=31 // pred_fallthru
          _
        // Predicated region
        $region53: #{tpu_custom_call.1} parent=31 // pred_check
          %p1883 = pneg %p203
        $region54: #{tpu_custom_call.1} parent=31 // pred_check_branch
          %1885 = sbr.rel (%p1883) target = $region56
        $region55: #{tpu_custom_call.1} parent=31 // pred_region
          _
        $region56: #{tpu_custom_call.1} parent=31 // pred_fallthru
          _
        // Predicated region
        $region57: #{tpu_custom_call.1} parent=31 // pred_check
          %p1886 = pneg %p229
        $region58: #{tpu_custom_call.1} parent=31 // pred_check_branch
          %1888 = sbr.rel (%p1886) target = $region60
        $region59: #{tpu_custom_call.1} parent=31 // pred_region
          _
        $region60: #{tpu_custom_call.1} parent=31 // pred_fallthru
          _
      $region32: #{tpu_custom_call.1} parent=5 // pred_fallthru
        _
      %p1889 = scmp.le.s32.totalorder 2, %s34
      // Predicated region
      $region61: #{tpu_custom_call.1} parent=5 // pred_check
        %p1890 = pneg %p1889
      $region62: #{tpu_custom_call.1} parent=5 // pred_check_branch
        %1892 = sbr.rel (%p1890) target = $region64
      $region63: #{tpu_custom_call.1} parent=5 // pred_region
        %s1893 = ssub.s32 %s34, 2
        // Predicated region
        $region65: #{tpu_custom_call.1} parent=63 // pred_check
          %p1894 = pneg %p131
        $region66: #{tpu_custom_call.1} parent=63 // pred_check_branch
          %1896 = sbr.rel (%p1894) target = $region68
        $region67: #{tpu_custom_call.1} parent=63 // pred_region
          %s1897 = sand.u32 %s116, 1
          %s1898 = scalar_lea.sflag [#allocation7], %s1897
          %s1899 = sand.u32 %s116, 1
          %s1900 = smul.addr %s1899, 8
          %s1901 = scalar_lea.vmem [#allocation10], %s1900
          %1902 = dma.done %s1898, 128
        $region68: #{tpu_custom_call.1} parent=63 // pred_fallthru
          _
        // Predicated region
        $region69: #{tpu_custom_call.1} parent=63 // pred_check
          %p1903 = pneg %p157
        $region70: #{tpu_custom_call.1} parent=63 // pred_check_branch
          %1905 = sbr.rel (%p1903) target = $region72
        $region71: #{tpu_custom_call.1} parent=63 // pred_region
          %s1906 = sand.u32 %s142, 1
          %s1907 = scalar_lea.sflag [#allocation12], %s1906
          %s1908 = sand.u32 %s142, 1
          %s1909 = smul.addr %s1908, 8
          %s1910 = scalar_lea.vmem [#allocation11], %s1909
          %1911 = dma.done %s1907, 128
        $region72: #{tpu_custom_call.1} parent=63 // pred_fallthru
          _
        // Predicated region
        $region73: #{tpu_custom_call.1} parent=63 // pred_check
          %p1912 = pneg %p183
        $region74: #{tpu_custom_call.1} parent=63 // pred_check_branch
          %1914 = sbr.rel (%p1912) target = $region76
        $region75: #{tpu_custom_call.1} parent=63 // pred_region
          %p1915 = scmp.lt.s32.totalorder %s40, 1
          %s1916 = scalar_select %p1915, %s40, 1
          %s1917 = smul.addr %s1916, 8
          %s1918 = scalar_lea.vmem %s7, %s1917
        $region76: #{tpu_custom_call.1} parent=63 // pred_fallthru
          _
        // Predicated region
        $region77: #{tpu_custom_call.1} parent=63 // pred_check
          %p1919 = pneg %p209
        $region78: #{tpu_custom_call.1} parent=63 // pred_check_branch
          %1921 = sbr.rel (%p1919) target = $region80
        $region79: #{tpu_custom_call.1} parent=63 // pred_region
          %p1922 = scmp.lt.s32.totalorder %s40, 1
          %s1923 = scalar_select %p1922, %s40, 1
          %s1924 = smul.addr %s1923, 8
          %s1925 = scalar_lea.vmem %s8, %s1924
        $region80: #{tpu_custom_call.1} parent=63 // pred_fallthru
          _
        // Predicated region
        $region81: #{tpu_custom_call.1} parent=63 // pred_check
          %p1926 = pneg %p235
        $region82: #{tpu_custom_call.1} parent=63 // pred_check_branch
          %1928 = sbr.rel (%p1926) target = $region84
        $region83: #{tpu_custom_call.1} parent=63 // pred_region
          %p1929 = scmp.lt.s32.totalorder %s40, 1
          %s1930 = scalar_select %p1929, %s40, 1
          %s1931 = smul.addr %s1930, 8
          %s1932 = scalar_lea.vmem %s9, %s1931
        $region84: #{tpu_custom_call.1} parent=63 // pred_fallthru
          _
      $region64: #{tpu_custom_call.1} parent=5 // pred_fallthru
        _
    $region6: #{tpu_custom_call.1} parent=1 // loop_footer
      %s38 = sadd.s32 1, %s34
    $region7: #{tpu_custom_call.1} parent=1 // loop_footer_branch
      %33 = sbr.rel target = $region3
    $region8: #{tpu_custom_call.1} parent=1 // loop_exit
      _
    %1933 = vsyncpa [#allocation6], 1
    %s1934 = scalar_lea.sflag [#allocation6], 1
    %1935 = vsyncpa %s1934, 1
    %1936 = vsyncpa [#allocation7], 1
    %s1937 = scalar_lea.sflag [#allocation7], 1
    %1938 = vsyncpa %s1937, 1
    %1939 = vsyncpa [#allocation12], 1
    %s1940 = scalar_lea.sflag [#allocation12], 1
    %1941 = vsyncpa %s1940, 1
    %1942 = vsyncpa [#allocation8], 1
    %s1943 = scalar_lea.sflag [#allocation8], 1
    %1944 = vsyncpa %s1943, 1

</llo_original>
